<compile_context>
chip_gen: v7x
topology: tpu7x:2x2x1
jax: 0.10.0
libtpu: 0.0.40
codegen_flags: <defaults>
</compile_context>

<pallas_src>
import jax
import jax.numpy as jnp
from jax.experimental import pallas as pl
from jax.experimental.pallas import tpu as pltpu


# -----------------------------------------------------------------------------
# Fused kernel: forward_features + diffusion training step
# -----------------------------------------------------------------------------
def fused_kernel(
    # scalar prefetch (SMEM, int32)
    speakers_ref, src_lens_ref, mel_lens_ref, t_ref,
    # tensor inputs
    contents_ref, pitches_ref, mels_ref, noise_ref,
    spk_ref, temb_ref,                       # gathered rows (prefetch index_map)
    acp_ref, s1m_ref,                        # SMEM f32 schedule tables
    wt_ref, bt_ref, wp_ref, bp_ref,          # text / pitch encoders
    wx_ref, wc_ref, b1_ref, w2_ref, b2_ref,  # denoiser MLP (pre-split W1)
    # outputs
    feat_ref, eps_ref, loss_ref,
):
    b = pl.program_id(0)
    tt = pl.program_id(1)
    tile_t = contents_ref.shape[1]

    # ---------------- forward_features ----------------
    contents = contents_ref[0]                                        # (tile_T, C_pad) bf16
    text = jnp.dot(contents, wt_ref[...],
                   preferred_element_type=jnp.float32) + bt_ref[...]  # (tile_T, H) f32

    # get_mask_from_lengths: True = padding (global row index = tt*tile_T + i)
    ids = tt * tile_t + jax.lax.broadcasted_iota(jnp.int32, (tile_t, 1), 0)
    src_pad = ids >= src_lens_ref[b]                                  # (tile_T, 1)
    text = jnp.where(src_pad, 0.0, text)

    # NOTE: matching the PyTorch reference, only the text-encoder output is
    # masked; speaker + pitch embeddings are added unmasked.
    spk = spk_ref[0]                                                  # (1, H)
    pitch = pitches_ref[0] * wp_ref[...] + bp_ref[...]                # (tile_T, H)

    features = text + spk + pitch                                     # f32, stays in VMEM
    features_b16 = features.astype(jnp.bfloat16)
    feat_ref[0] = features_b16                                        # bf16 writeback

    # ---------------- diffusion (q_sample + denoiser + masked sq-err) --------
    t_b = t_ref[b]
    a = acp_ref[t_b]                                                  # f32 scalar (SMEM)
    s = s1m_ref[t_b]
    noise = noise_ref[0]                                              # (tile_T, M) f32
    x_noisy = a * mels_ref[0] + s * noise                             # (tile_T, M) f32

    # two K=128 MXU passes, no in-kernel concat: [x_noisy | features] @ [wx; wc]
    h = jnp.dot(x_noisy.astype(jnp.bfloat16), wx_ref[...],
                preferred_element_type=jnp.float32)
    h = h + jnp.dot(features_b16, wc_ref[...],
                    preferred_element_type=jnp.float32)
    h = jnp.maximum(h + temb_ref[0] + b1_ref[...], 0.0)               # (tile_T, Dh)
    eps_hat = jnp.dot(h.astype(jnp.bfloat16), w2_ref[...],
                      preferred_element_type=jnp.float32) + b2_ref[...]
    eps_ref[0] = eps_hat.astype(jnp.bfloat16)                         # bf16 writeback

    mel_pad = ids >= mel_lens_ref[b]                                  # (tile_T, 1)
    diff = jnp.where(mel_pad, 0.0, eps_hat - noise)

    # independent per-(b, tile) partial sum -> both grid axes stay "parallel"
    loss_ref[0] = jnp.sum(diff * diff, keepdims=True)                 # (1, 1)


# -----------------------------------------------------------------------------
# Wrapper
# -----------------------------------------------------------------------------
def _round_up(x, m):
    return (x + m - 1) // m * m


def diffsinger_fused_pallas(speakers, src_lens, mel_lens, t,
                            contents, pitches, mels, noise, params,
                            tile_t=None, vmem_budget_bytes=48 * 1024 * 1024):
    B, T, C = contents.shape
    M = mels.shape[2]
    H = params["wt"].shape[1]
    Dh = params["wx"].shape[1]
    n_spk = params["spk_tbl"].shape[0]
    n_steps = params["t_emb"].shape[0]

    C_pad = _round_up(C, 128)                 # full-lane contents loads, MXU-deep K

    # ---- tile selection: biggest sublane-aligned T tile inside the VMEM budget
    # (streamed tiles and weights are double-buffered by the pipeline).
    per_row_bytes = 2 * C_pad + 4 + 4 * M + 4 * M + 2 * H + 2 * M     # in+out / row
    weight_bytes = (2 * (C_pad * H + M * Dh + H * Dh + Dh * M)
                    + 4 * (3 * H + 2 * Dh + 2 * M))
    if tile_t is None:
        cap = (vmem_budget_bytes // 2 - 2 * weight_bytes) // per_row_bytes
        cap = max(8, min(2048, (cap // 8) * 8))
        T8 = _round_up(T, 8)
        if T8 <= cap:
            tile_t = T8                        # whole sequence in one tile
        else:
            n_tiles = -(-T8 // cap)
            tile_t = _round_up(-(-T8 // n_tiles), 8)
    assert tile_t % 8 == 0
    n_tt = -(-T // tile_t)
    T_pad = n_tt * tile_t

    # ---- host-side padding (length masks keep the padded rows inert) --------
    def pad_t(x):
        return x if T_pad == T else jnp.pad(x, ((0, 0), (0, T_pad - T), (0, 0)))

    contents_p = pad_t(contents)
    if C_pad != C:
        contents_p = jnp.pad(contents_p, ((0, 0), (0, 0), (0, C_pad - C)))
    contents_p = contents_p.astype(jnp.bfloat16)
    pitches_p = pad_t(pitches)
    mels_p = pad_t(mels)
    noise_p = pad_t(noise)

    wt = params["wt"]
    if C_pad != C:
        wt = jnp.pad(wt, ((0, C_pad - C), (0, 0)))    # zero rows: no-op in the dot

    spk_tbl = params["spk_tbl"].reshape(n_spk, 1, H)  # row-gather friendly
    t_emb = params["t_emb"].reshape(n_steps, 1, Dh)

    smem = pl.BlockSpec(memory_space=pltpu.MemorySpace.SMEM)
    # TODO(synk): mark the constant-index weight/bias specs pipeline_mode=
    #             pl.Buffered(1) once validated on the target jax version
    #             (frees a little double-buffer VMEM, most relevant on v7x).

    grid_spec = pltpu.PrefetchScalarGridSpec(
        num_scalar_prefetch=4,                     # speakers, src_lens, mel_lens, t
        grid=(B, n_tt),
        in_specs=[
            pl.BlockSpec((1, tile_t, C_pad), lambda b, tt, *_: (b, tt, 0)),   # contents bf16
            pl.BlockSpec((1, tile_t, 1), lambda b, tt, *_: (b, tt, 0)),       # pitches
            pl.BlockSpec((1, tile_t, M), lambda b, tt, *_: (b, tt, 0)),       # mels
            pl.BlockSpec((1, tile_t, M), lambda b, tt, *_: (b, tt, 0)),       # noise
            pl.BlockSpec((1, 1, H), lambda b, tt, spk, *_: (spk[b], 0, 0)),   # speaker row
            pl.BlockSpec((1, 1, Dh),
                         lambda b, tt, spk, sl, ml, t: (t[b], 0, 0)),         # temb row
            smem,                                                             # sqrt_acp
            smem,                                                             # sqrt_1m_acp
            pl.BlockSpec((C_pad, H), lambda b, tt, *_: (0, 0)),               # wt (bf16)
            pl.BlockSpec((1, H), lambda b, tt, *_: (0, 0)),                   # bt
            pl.BlockSpec((1, H), lambda b, tt, *_: (0, 0)),                   # wp
            pl.BlockSpec((1, H), lambda b, tt, *_: (0, 0)),                   # bp
            pl.BlockSpec((M, Dh), lambda b, tt, *_: (0, 0)),                  # wx (bf16)
            pl.BlockSpec((H, Dh), lambda b, tt, *_: (0, 0)),                  # wc (bf16)
            pl.BlockSpec((1, Dh), lambda b, tt, *_: (0, 0)),                  # b1
            pl.BlockSpec((Dh, M), lambda b, tt, *_: (0, 0)),                  # w2 (bf16)
            pl.BlockSpec((1, M), lambda b, tt, *_: (0, 0)),                   # b2
        ],
        out_specs=(
            pl.BlockSpec((1, tile_t, H), lambda b, tt, *_: (b, tt, 0)),       # features bf16
            pl.BlockSpec((1, tile_t, M), lambda b, tt, *_: (b, tt, 0)),       # eps_hat bf16
            pl.BlockSpec((1, 1, 1), lambda b, tt, *_: (b * n_tt + tt, 0, 0)), # partial sq-err
        ),
    )

    # roofline hint for the XLA scheduler (matmul flops + streamed bytes)
    flops = 2 * B * T_pad * (C_pad * H + M * Dh + H * Dh + Dh * M)
    bytes_accessed = (B * T_pad * per_row_bytes + weight_bytes
                      + 4 * n_spk * H + 4 * n_steps * Dh
                      + 4 * (B * n_tt + 4 * B + 2 * n_steps))
    cost = pl.CostEstimate(flops=int(flops), transcendentals=0,
                           bytes_accessed=int(bytes_accessed))

    # explicit, generation-safe VMEM limit (v7x only has 64 MiB physical)
    vmem_limit = int(min(48 * 1024 * 1024,
                         max(32 * 1024 * 1024,
                             4 * tile_t * per_row_bytes + 4 * weight_bytes)))

    feats, eps, sq = pl.pallas_call(
        fused_kernel,
        grid_spec=grid_spec,
        out_shape=(
            jax.ShapeDtypeStruct((B, T_pad, H), jnp.bfloat16),
            jax.ShapeDtypeStruct((B, T_pad, M), jnp.bfloat16),
            jax.ShapeDtypeStruct((B * n_tt, 1, 1), jnp.float32),
        ),
        compiler_params=pltpu.CompilerParams(
            dimension_semantics=("parallel", "parallel"),   # batch AND T-tiles across TCs
            vmem_limit_bytes=vmem_limit),
        cost_estimate=cost,
    )(speakers, src_lens, mel_lens, t,
      contents_p, pitches_p, mels_p, noise_p,
      spk_tbl, t_emb, params["sqrt_acp"], params["sqrt_1m_acp"],
      wt, params["bt"], params["wp"], params["bp"],
      params["wx"], params["wc"], params["b1"], params["w2"], params["b2"])

    return feats[:, :T], eps[:, :T], sq


def diffsinger_forward(speakers, contents, src_lens, max_src_len,
                       mels, mel_lens, max_mel_len, pitches,
                       params, t):
    """Mirrors DiffSinger.forward (training mode)."""
    M = mels.shape[2]

    features, eps_hat, sq_parts = diffsinger_fused_pallas(
        speakers, src_lens, mel_lens, t,
        contents, pitches, mels, params["fixed_noise"], params)

    # masks returned in the dict (trivial glue; recomputed inside the kernel)
    ids = jnp.arange(max_src_len)[None, :]
    src_masks = ids >= src_lens[:, None]
    ids_m = jnp.arange(max_mel_len)[None, :]
    mel_masks = ids_m >= mel_lens[:, None]

    # global masked mean over valid mel elements (guarded against all-zero lens)
    n_valid = jnp.maximum(jnp.sum(mel_lens).astype(jnp.float32) * M, 1.0)
    loss = jnp.sum(sq_parts) / n_valid

    return dict(loss=loss, noise_pred=eps_hat, features=features,
                src_masks=src_masks, mel_masks=mel_masks)


# -----------------------------------------------------------------------------
# Deterministic parameter construction (lane-aligned H, M, Dh)
# -----------------------------------------------------------------------------
def build_params(key, B, T, C, H, M, Dh, n_spk, n_steps):
    ks = jax.random.split(key, 12)
    scale = 0.1
    params = dict(
        # bf16 matmul weights (MXU-native), f32 biases / elementwise params
        wt=(scale * jax.random.normal(ks[0], (C, H), jnp.float32)).astype(jnp.bfloat16),
        bt=scale * jax.random.normal(ks[1], (1, H), jnp.float32),
        wp=scale * jax.random.normal(ks[2], (1, H), jnp.float32),
        bp=scale * jax.random.normal(ks[3], (1, H), jnp.float32),
        spk_tbl=scale * jax.random.normal(ks[4], (n_spk, H), jnp.float32),
        # denoiser input projection, pre-split (no in-kernel concat):
        wx=(scale * jax.random.normal(ks[5], (M, Dh), jnp.float32)).astype(jnp.bfloat16),
        wc=(scale * jax.random.normal(ks[6], (H, Dh), jnp.float32)).astype(jnp.bfloat16),
        b1=scale * jax.random.normal(ks[7], (1, Dh), jnp.float32),
        w2=(scale * jax.random.normal(ks[8], (Dh, M), jnp.float32)).astype(jnp.bfloat16),
        b2=scale * jax.random.normal(ks[9], (1, M), jnp.float32),
        t_emb=scale * jax.random.normal(ks[10], (n_steps, Dh), jnp.float32),
        # TODO(synk): fixed_noise is deterministic by design here; production
        #             DDPM training should draw fresh Gaussian noise per step.
        fixed_noise=jax.random.normal(ks[11], (B, T, M), jnp.float32),
    )
    # linear beta schedule
    betas = jnp.linspace(1e-4, 2e-2, n_steps, dtype=jnp.float32)
    acp = jnp.cumprod(1.0 - betas)
    params["sqrt_acp"] = jnp.sqrt(acp)
    params["sqrt_1m_acp"] = jnp.sqrt(1.0 - acp)
    return params


if __name__ == "__main__":
    # lane-aligned model dims (H = M = Dh = 128), C padded to 128 in the wrapper
    B, T, C, H, M, Dh = 2, 16, 64, 128, 128, 128
    n_spk, n_steps = 4, 8

    key = jax.random.PRNGKey(0)
    kp, kc, km, kpitch = jax.random.split(key, 4)

    params = build_params(kp, B, T, C, H, M, Dh, n_spk, n_steps)

    speakers = jnp.array([0, 2], dtype=jnp.int32)
    src_lens = jnp.array([T, 11], dtype=jnp.int32)
    mel_lens = jnp.array([T, 13], dtype=jnp.int32)
    contents = jax.random.normal(kc, (B, T, C), jnp.float32)
    mels = jax.random.normal(km, (B, T, M), jnp.float32)
    pitches = jax.random.normal(kpitch, (B, T, 1), jnp.float32)
    t = jnp.array([3, 6], dtype=jnp.int32)          # deterministic diffusion steps

    out = diffsinger_forward(speakers, contents, src_lens, T,
                             mels, mel_lens, T, pitches, params, t)
    jax.block_until_ready(out)

    assert out["features"].shape == (B, T, H)
    assert out["noise_pred"].shape == (B, T, M)
    assert bool(jnp.isfinite(out["loss"]))
    print("KERNEL_OK")
</pallas_src>

<mosaic_0001>
module attributes {stable_mosaic.version = 11 : i64} {
  func.func @fused_kernel(%arg0: i32, %arg1: i32, %arg2: memref<2xi32, #tpu.memory_space<smem>>, %arg3: memref<2xi32, #tpu.memory_space<smem>>, %arg4: memref<2xi32, #tpu.memory_space<smem>>, %arg5: memref<2xi32, #tpu.memory_space<smem>>, %arg6: memref<1x16x128xbf16, #tpu.memory_space<vmem>>, %arg7: memref<1x16x1xf32, #tpu.memory_space<vmem>>, %arg8: memref<1x16x128xf32, #tpu.memory_space<vmem>>, %arg9: memref<1x16x128xf32, #tpu.memory_space<vmem>>, %arg10: memref<1x1x128xf32, #tpu.memory_space<vmem>>, %arg11: memref<1x1x128xf32, #tpu.memory_space<vmem>>, %arg12: memref<8xf32, #tpu.memory_space<smem>>, %arg13: memref<8xf32, #tpu.memory_space<smem>>, %arg14: memref<128x128xbf16, #tpu.memory_space<vmem>>, %arg15: memref<1x128xf32, #tpu.memory_space<vmem>>, %arg16: memref<1x128xf32, #tpu.memory_space<vmem>>, %arg17: memref<1x128xf32, #tpu.memory_space<vmem>>, %arg18: memref<128x128xbf16, #tpu.memory_space<vmem>>, %arg19: memref<128x128xbf16, #tpu.memory_space<vmem>>, %arg20: memref<1x128xf32, #tpu.memory_space<vmem>>, %arg21: memref<128x128xbf16, #tpu.memory_space<vmem>>, %arg22: memref<1x128xf32, #tpu.memory_space<vmem>>, %arg23: memref<1x16x128xbf16, #tpu.memory_space<vmem>>, %arg24: memref<1x16x128xbf16, #tpu.memory_space<vmem>>, %arg25: memref<1x1x1xf32, #tpu.memory_space<vmem>>) attributes {dimension_semantics = [#tpu.dimension_semantics<parallel>, #tpu.dimension_semantics<parallel>], iteration_bounds = array<i64: 2, 1>, scalar_prefetch = 4 : i64, scratch_operands = 0 : i64, tpu.core_type = #tpu.core_type<tc>, window_params = [{transform_indices = @transform_0, window_bounds = array<i64: 1, 16, 128>}, {transform_indices = @transform_1, window_bounds = array<i64: 1, 16, 1>}, {transform_indices = @transform_2, window_bounds = array<i64: 1, 16, 128>}, {transform_indices = @transform_3, window_bounds = array<i64: 1, 16, 128>}, {transform_indices = @transform_4, window_bounds = array<i64: 1, 1, 128>}, {transform_indices = @transform_5, window_bounds = array<i64: 1, 1, 128>}, {transform_indices = @transform_6, window_bounds = array<i64: 8>}, {transform_indices = @transform_7, window_bounds = array<i64: 8>}, {pipeline_mode = #tpu.pipeline_mode<synchronous>, transform_indices = @transform_8, window_bounds = array<i64: 128, 128>}, {pipeline_mode = #tpu.pipeline_mode<synchronous>, transform_indices = @transform_9, window_bounds = array<i64: 1, 128>}, {pipeline_mode = #tpu.pipeline_mode<synchronous>, transform_indices = @transform_10, window_bounds = array<i64: 1, 128>}, {pipeline_mode = #tpu.pipeline_mode<synchronous>, transform_indices = @transform_11, window_bounds = array<i64: 1, 128>}, {pipeline_mode = #tpu.pipeline_mode<synchronous>, transform_indices = @transform_12, window_bounds = array<i64: 128, 128>}, {pipeline_mode = #tpu.pipeline_mode<synchronous>, transform_indices = @transform_13, window_bounds = array<i64: 128, 128>}, {pipeline_mode = #tpu.pipeline_mode<synchronous>, transform_indices = @transform_14, window_bounds = array<i64: 1, 128>}, {pipeline_mode = #tpu.pipeline_mode<synchronous>, transform_indices = @transform_15, window_bounds = array<i64: 128, 128>}, {pipeline_mode = #tpu.pipeline_mode<synchronous>, transform_indices = @transform_16, window_bounds = array<i64: 1, 128>}, {transform_indices = @transform_17, window_bounds = array<i64: 1, 16, 128>}, {transform_indices = @transform_18, window_bounds = array<i64: 1, 16, 128>}, {transform_indices = @transform_19, window_bounds = array<i64: 1, 1, 1>}]} {
    %c0 = arith.constant 0 : index
    %c0_0 = arith.constant 0 : index
    %c0_1 = arith.constant 0 : index
    %0 = vector.load %arg6[%c0, %c0_0, %c0_1] : memref<1x16x128xbf16, #tpu.memory_space<vmem>>, vector<1x16x128xbf16>
    %1 = vector.shape_cast %0 : vector<1x16x128xbf16> to vector<16x128xbf16>
    %c0_2 = arith.constant 0 : index
    %c0_3 = arith.constant 0 : index
    %2 = vector.load %arg14[%c0_2, %c0_3] : memref<128x128xbf16, #tpu.memory_space<vmem>>, vector<128x128xbf16>
    %cst = arith.constant dense<0.000000e+00> : vector<16x128xf32>
    %3 = tpu.matmul %1, %2, %cst {dimension_numbers = #tpu.dot_dimension_numbers<[1], [0], [0], [1], [0, 0, 1, 1], [], []>} : vector<16x128xbf16>, vector<128x128xbf16>, vector<16x128xf32> -> vector<16x128xf32>
    %c0_4 = arith.constant 0 : index
    %c0_5 = arith.constant 0 : index
    %4 = vector.load %arg15[%c0_4, %c0_5] : memref<1x128xf32, #tpu.memory_space<vmem>>, vector<1x128xf32>
    %5 = vector.broadcast %4 : vector<1x128xf32> to vector<16x128xf32>
    %6 = arith.addf %3, %5 : vector<16x128xf32>
    %c16_i32 = arith.constant 16 : i32
    %7 = arith.muli %arg1, %c16_i32 : i32
    %8 = tpu.iota {dimensions = array<i32: 0>} : vector<16x1xi32>
    %9 = vector.broadcast %7 : i32 to vector<16x1xi32>
    %10 = arith.addi %9, %8 : vector<16x1xi32>
    %11 = arith.index_cast %arg0 : i32 to index
    %12 = memref.load %arg3[%11] : memref<2xi32, #tpu.memory_space<smem>>
    %13 = vector.broadcast %12 : i32 to vector<16x1xi32>
    %14 = arith.cmpi sge, %10, %13 : vector<16x1xi32>
    %cst_6 = arith.constant 0.000000e+00 : f32
    %15 = vector.shape_cast %14 : vector<16x1xi1> to vector<16x1xi1>
    %16 = vector.broadcast %15 : vector<16x1xi1> to vector<16x128xi1>
    %17 = vector.broadcast %cst_6 : f32 to vector<16x128xf32>
    %18 = arith.select %16, %17, %6 : vector<16x128xi1>, vector<16x128xf32>
    %c0_7 = arith.constant 0 : index
    %c0_8 = arith.constant 0 : index
    %c0_9 = arith.constant 0 : index
    %19 = vector.load %arg10[%c0_7, %c0_8, %c0_9] : memref<1x1x128xf32, #tpu.memory_space<vmem>>, vector<1x1x128xf32>
    %20 = vector.shape_cast %19 : vector<1x1x128xf32> to vector<1x128xf32>
    %c0_10 = arith.constant 0 : index
    %c0_11 = arith.constant 0 : index
    %c0_12 = arith.constant 0 : index
    %21 = vector.load %arg7[%c0_10, %c0_11, %c0_12] : memref<1x16x1xf32, #tpu.memory_space<vmem>>, vector<1x16x1xf32>
    %22 = vector.shape_cast %21 : vector<1x16x1xf32> to vector<16x1xf32>
    %c0_13 = arith.constant 0 : index
    %c0_14 = arith.constant 0 : index
    %23 = vector.load %arg16[%c0_13, %c0_14] : memref<1x128xf32, #tpu.memory_space<vmem>>, vector<1x128xf32>
    %24 = vector.broadcast %22 : vector<16x1xf32> to vector<16x128xf32>
    %25 = vector.broadcast %23 : vector<1x128xf32> to vector<16x128xf32>
    %26 = arith.mulf %24, %25 : vector<16x128xf32>
    %c0_15 = arith.constant 0 : index
    %c0_16 = arith.constant 0 : index
    %27 = vector.load %arg17[%c0_15, %c0_16] : memref<1x128xf32, #tpu.memory_space<vmem>>, vector<1x128xf32>
    %28 = vector.broadcast %27 : vector<1x128xf32> to vector<16x128xf32>
    %29 = arith.addf %26, %28 : vector<16x128xf32>
    %30 = vector.broadcast %20 : vector<1x128xf32> to vector<16x128xf32>
    %31 = arith.addf %18, %30 : vector<16x128xf32>
    %32 = arith.addf %31, %29 : vector<16x128xf32>
    %33 = arith.truncf %32 : vector<16x128xf32> to vector<16x128xbf16>
    %c0_17 = arith.constant 0 : index
    %c0_18 = arith.constant 0 : index
    %c0_19 = arith.constant 0 : index
    %34 = vector.load %arg23[%c0_17, %c0_18, %c0_19] : memref<1x16x128xbf16, #tpu.memory_space<vmem>>, vector<1x16x128xbf16>
    %35 = vector.shape_cast %34 : vector<1x16x128xbf16> to vector<16x128xbf16>
    %36 = vector.shape_cast %33 : vector<16x128xbf16> to vector<1x16x128xbf16>
    tpu.vector_store %arg23[%c0_17, %c0_18, %c0_19], %36 {strides = array<i32>} : memref<1x16x128xbf16, #tpu.memory_space<vmem>>, vector<1x16x128xbf16>,
    %37 = arith.index_cast %arg0 : i32 to index
    %38 = memref.load %arg5[%37] : memref<2xi32, #tpu.memory_space<smem>>
    %39 = arith.index_cast %38 : i32 to index
    %40 = memref.load %arg12[%39] : memref<8xf32, #tpu.memory_space<smem>>
    %41 = arith.index_cast %38 : i32 to index
    %42 = memref.load %arg13[%41] : memref<8xf32, #tpu.memory_space<smem>>
    %c0_20 = arith.constant 0 : index
    %c0_21 = arith.constant 0 : index
    %c0_22 = arith.constant 0 : index
    %43 = vector.load %arg9[%c0_20, %c0_21, %c0_22] : memref<1x16x128xf32, #tpu.memory_space<vmem>>, vector<1x16x128xf32>
    %44 = vector.shape_cast %43 : vector<1x16x128xf32> to vector<16x128xf32>
    %c0_23 = arith.constant 0 : index
    %c0_24 = arith.constant 0 : index
    %c0_25 = arith.constant 0 : index
    %45 = vector.load %arg8[%c0_23, %c0_24, %c0_25] : memref<1x16x128xf32, #tpu.memory_space<vmem>>, vector<1x16x128xf32>
    %46 = vector.shape_cast %45 : vector<1x16x128xf32> to vector<16x128xf32>
    %47 = vector.broadcast %40 : f32 to vector<16x128xf32>
    %48 = arith.mulf %47, %46 : vector<16x128xf32>
    %49 = vector.broadcast %42 : f32 to vector<16x128xf32>
    %50 = arith.mulf %49, %44 : vector<16x128xf32>
    %51 = arith.addf %48, %50 : vector<16x128xf32>
    %52 = arith.truncf %51 : vector<16x128xf32> to vector<16x128xbf16>
    %c0_26 = arith.constant 0 : index
    %c0_27 = arith.constant 0 : index
    %53 = vector.load %arg18[%c0_26, %c0_27] : memref<128x128xbf16, #tpu.memory_space<vmem>>, vector<128x128xbf16>
    %cst_28 = arith.constant dense<0.000000e+00> : vector<16x128xf32>
    %54 = tpu.matmul %52, %53, %cst_28 {dimension_numbers = #tpu.dot_dimension_numbers<[1], [0], [0], [1], [0, 0, 1, 1], [], []>} : vector<16x128xbf16>, vector<128x128xbf16>, vector<16x128xf32> -> vector<16x128xf32>
    %c0_29 = arith.constant 0 : index
    %c0_30 = arith.constant 0 : index
    %55 = vector.load %arg19[%c0_29, %c0_30] : memref<128x128xbf16, #tpu.memory_space<vmem>>, vector<128x128xbf16>
    %cst_31 = arith.constant dense<0.000000e+00> : vector<16x128xf32>
    %56 = tpu.matmul %33, %55, %cst_31 {dimension_numbers = #tpu.dot_dimension_numbers<[1], [0], [0], [1], [0, 0, 1, 1], [], []>} : vector<16x128xbf16>, vector<128x128xbf16>, vector<16x128xf32> -> vector<16x128xf32>
    %57 = arith.addf %54, %56 : vector<16x128xf32>
    %c0_32 = arith.constant 0 : index
    %c0_33 = arith.constant 0 : index
    %c0_34 = arith.constant 0 : index
    %58 = vector.load %arg11[%c0_32, %c0_33, %c0_34] : memref<1x1x128xf32, #tpu.memory_space<vmem>>, vector<1x1x128xf32>
    %59 = vector.shape_cast %58 : vector<1x1x128xf32> to vector<1x128xf32>
    %60 = vector.broadcast %59 : vector<1x128xf32> to vector<16x128xf32>
    %61 = arith.addf %57, %60 : vector<16x128xf32>
    %c0_35 = arith.constant 0 : index
    %c0_36 = arith.constant 0 : index
    %62 = vector.load %arg20[%c0_35, %c0_36] : memref<1x128xf32, #tpu.memory_space<vmem>>, vector<1x128xf32>
    %63 = vector.broadcast %62 : vector<1x128xf32> to vector<16x128xf32>
    %64 = arith.addf %61, %63 : vector<16x128xf32>
    %cst_37 = arith.constant 0.000000e+00 : f32
    %65 = vector.broadcast %cst_37 : f32 to vector<16x128xf32>
    %66 = arith.maximumf %64, %65 : vector<16x128xf32>
    %67 = arith.truncf %66 : vector<16x128xf32> to vector<16x128xbf16>
    %c0_38 = arith.constant 0 : index
    %c0_39 = arith.constant 0 : index
    %68 = vector.load %arg21[%c0_38, %c0_39] : memref<128x128xbf16, #tpu.memory_space<vmem>>, vector<128x128xbf16>
    %cst_40 = arith.constant dense<0.000000e+00> : vector<16x128xf32>
    %69 = tpu.matmul %67, %68, %cst_40 {dimension_numbers = #tpu.dot_dimension_numbers<[1], [0], [0], [1], [0, 0, 1, 1], [], []>} : vector<16x128xbf16>, vector<128x128xbf16>, vector<16x128xf32> -> vector<16x128xf32>
    %c0_41 = arith.constant 0 : index
    %c0_42 = arith.constant 0 : index
    %70 = vector.load %arg22[%c0_41, %c0_42] : memref<1x128xf32, #tpu.memory_space<vmem>>, vector<1x128xf32>
    %71 = vector.broadcast %70 : vector<1x128xf32> to vector<16x128xf32>
    %72 = arith.addf %69, %71 : vector<16x128xf32>
    %73 = arith.truncf %72 : vector<16x128xf32> to vector<16x128xbf16>
    %c0_43 = arith.constant 0 : index
    %c0_44 = arith.constant 0 : index
    %c0_45 = arith.constant 0 : index
    %74 = vector.load %arg24[%c0_43, %c0_44, %c0_45] : memref<1x16x128xbf16, #tpu.memory_space<vmem>>, vector<1x16x128xbf16>
    %75 = vector.shape_cast %74 : vector<1x16x128xbf16> to vector<16x128xbf16>
    %76 = vector.shape_cast %73 : vector<16x128xbf16> to vector<1x16x128xbf16>
    tpu.vector_store %arg24[%c0_43, %c0_44, %c0_45], %76 {strides = array<i32>} : memref<1x16x128xbf16, #tpu.memory_space<vmem>>, vector<1x16x128xbf16>,
    %77 = arith.index_cast %arg0 : i32 to index
    %78 = memref.load %arg4[%77] : memref<2xi32, #tpu.memory_space<smem>>
    %79 = vector.broadcast %78 : i32 to vector<16x1xi32>
    %80 = arith.cmpi sge, %10, %79 : vector<16x1xi32>
    %81 = arith.subf %72, %44 : vector<16x128xf32>
    %cst_46 = arith.constant 0.000000e+00 : f32
    %82 = vector.shape_cast %80 : vector<16x1xi1> to vector<16x1xi1>
    %83 = vector.broadcast %82 : vector<16x1xi1> to vector<16x128xi1>
    %84 = vector.broadcast %cst_46 : f32 to vector<16x128xf32>
    %85 = arith.select %83, %84, %81 : vector<16x128xi1>, vector<16x128xf32>
    %86 = arith.mulf %85, %85 : vector<16x128xf32>
    %87 = vector.shape_cast %86 : vector<16x128xf32> to vector<1x16x128xf32>
    %cst_47 = arith.constant dense<0.000000e+00> : vector<1xf32>
    %88 = vector.multi_reduction <add>, %87, %cst_47 [1, 2] : vector<1x16x128xf32> to vector<1xf32>
    %89 = vector.shape_cast %88 : vector<1xf32> to vector<1x1x1xf32>
    %90 = vector.extract %89[0, 0, 0] : f32 from vector<1x1x1xf32>
    %91 = vector.broadcast %90 : f32 to vector<1x1xf32>
    %c0_48 = arith.constant 0 : index
    %c0_49 = arith.constant 0 : index
    %c0_50 = arith.constant 0 : index
    %92 = vector.load %arg25[%c0_48, %c0_49, %c0_50] : memref<1x1x1xf32, #tpu.memory_space<vmem>>, vector<1x1x1xf32>
    %93 = vector.shape_cast %92 : vector<1x1x1xf32> to vector<1x1xf32>
    %94 = vector.shape_cast %91 : vector<1x1xf32> to vector<1x1x1xf32>
    tpu.vector_store %arg25[%c0_48, %c0_49, %c0_50], %94 {strides = array<i32>} : memref<1x1x1xf32, #tpu.memory_space<vmem>>, vector<1x1x1xf32>,
    return
  }
  func.func @transform_0(%arg0: i32, %arg1: i32, %arg2: memref<2xi32, #tpu.memory_space<smem>>, %arg3: memref<2xi32, #tpu.memory_space<smem>>, %arg4: memref<2xi32, #tpu.memory_space<smem>>, %arg5: memref<2xi32, #tpu.memory_space<smem>>) -> (i32, i32, i32) {
    %c0_i32 = arith.constant 0 : i32
    %c0_i32_0 = arith.constant 0 : i32
    return %arg0, %arg1, %c0_i32 : i32, i32, i32
  }
  func.func @transform_1(%arg0: i32, %arg1: i32, %arg2: memref<2xi32, #tpu.memory_space<smem>>, %arg3: memref<2xi32, #tpu.memory_space<smem>>, %arg4: memref<2xi32, #tpu.memory_space<smem>>, %arg5: memref<2xi32, #tpu.memory_space<smem>>) -> (i32, i32, i32) {
    %c0_i32 = arith.constant 0 : i32
    %c0_i32_0 = arith.constant 0 : i32
    return %arg0, %arg1, %c0_i32 : i32, i32, i32
  }
  func.func @transform_2(%arg0: i32, %arg1: i32, %arg2: memref<2xi32, #tpu.memory_space<smem>>, %arg3: memref<2xi32, #tpu.memory_space<smem>>, %arg4: memref<2xi32, #tpu.memory_space<smem>>, %arg5: memref<2xi32, #tpu.memory_space<smem>>) -> (i32, i32, i32) {
    %c0_i32 = arith.constant 0 : i32
    %c0_i32_0 = arith.constant 0 : i32
    return %arg0, %arg1, %c0_i32 : i32, i32, i32
  }
  func.func @transform_3(%arg0: i32, %arg1: i32, %arg2: memref<2xi32, #tpu.memory_space<smem>>, %arg3: memref<2xi32, #tpu.memory_space<smem>>, %arg4: memref<2xi32, #tpu.memory_space<smem>>, %arg5: memref<2xi32, #tpu.memory_space<smem>>) -> (i32, i32, i32) {
    %c0_i32 = arith.constant 0 : i32
    %c0_i32_0 = arith.constant 0 : i32
    return %arg0, %arg1, %c0_i32 : i32, i32, i32
  }
  func.func @transform_4(%arg0: i32, %arg1: i32, %arg2: memref<2xi32, #tpu.memory_space<smem>>, %arg3: memref<2xi32, #tpu.memory_space<smem>>, %arg4: memref<2xi32, #tpu.memory_space<smem>>, %arg5: memref<2xi32, #tpu.memory_space<smem>>) -> (i32, i32, i32) {
    %0 = arith.index_cast %arg0 : i32 to index
    %1 = memref.load %arg2[%0] : memref<2xi32, #tpu.memory_space<smem>>
    %c0_i32 = arith.constant 0 : i32
    %c0_i32_0 = arith.constant 0 : i32
    %c0_i32_1 = arith.constant 0 : i32
    return %1, %c0_i32, %c0_i32_0 : i32, i32, i32
  }
  func.func @transform_5(%arg0: i32, %arg1: i32, %arg2: memref<2xi32, #tpu.memory_space<smem>>, %arg3: memref<2xi32, #tpu.memory_space<smem>>, %arg4: memref<2xi32, #tpu.memory_space<smem>>, %arg5: memref<2xi32, #tpu.memory_space<smem>>) -> (i32, i32, i32) {
    %0 = arith.index_cast %arg0 : i32 to index
    %1 = memref.load %arg5[%0] : memref<2xi32, #tpu.memory_space<smem>>
    %c0_i32 = arith.constant 0 : i32
    %c0_i32_0 = arith.constant 0 : i32
    %c0_i32_1 = arith.constant 0 : i32
    return %1, %c0_i32, %c0_i32_0 : i32, i32, i32
  }
  func.func @transform_6(%arg0: i32, %arg1: i32, %arg2: memref<2xi32, #tpu.memory_space<smem>>, %arg3: memref<2xi32, #tpu.memory_space<smem>>, %arg4: memref<2xi32, #tpu.memory_space<smem>>, %arg5: memref<2xi32, #tpu.memory_space<smem>>) -> i32 {
    %c0_i32 = arith.constant 0 : i32
    %c0_i32_0 = arith.constant 0 : i32
    return %c0_i32 : i32
  }
  func.func @transform_7(%arg0: i32, %arg1: i32, %arg2: memref<2xi32, #tpu.memory_space<smem>>, %arg3: memref<2xi32, #tpu.memory_space<smem>>, %arg4: memref<2xi32, #tpu.memory_space<smem>>, %arg5: memref<2xi32, #tpu.memory_space<smem>>) -> i32 {
    %c0_i32 = arith.constant 0 : i32
    %c0_i32_0 = arith.constant 0 : i32
    return %c0_i32 : i32
  }
  func.func @transform_8(%arg0: i32, %arg1: i32, %arg2: memref<2xi32, #tpu.memory_space<smem>>, %arg3: memref<2xi32, #tpu.memory_space<smem>>, %arg4: memref<2xi32, #tpu.memory_space<smem>>, %arg5: memref<2xi32, #tpu.memory_space<smem>>) -> (i32, i32) {
    %c0_i32 = arith.constant 0 : i32
    %c0_i32_0 = arith.constant 0 : i32
    %c0_i32_1 = arith.constant 0 : i32
    return %c0_i32, %c0_i32_0 : i32, i32
  }
  func.func @transform_9(%arg0: i32, %arg1: i32, %arg2: memref<2xi32, #tpu.memory_space<smem>>, %arg3: memref<2xi32, #tpu.memory_space<smem>>, %arg4: memref<2xi32, #tpu.memory_space<smem>>, %arg5: memref<2xi32, #tpu.memory_space<smem>>) -> (i32, i32) {
    %c0_i32 = arith.constant 0 : i32
    %c0_i32_0 = arith.constant 0 : i32
    %c0_i32_1 = arith.constant 0 : i32
    return %c0_i32, %c0_i32_0 : i32, i32
  }
  func.func @transform_10(%arg0: i32, %arg1: i32, %arg2: memref<2xi32, #tpu.memory_space<smem>>, %arg3: memref<2xi32, #tpu.memory_space<smem>>, %arg4: memref<2xi32, #tpu.memory_space<smem>>, %arg5: memref<2xi32, #tpu.memory_space<smem>>) -> (i32, i32) {
    %c0_i32 = arith.constant 0 : i32
    %c0_i32_0 = arith.constant 0 : i32
    %c0_i32_1 = arith.constant 0 : i32
    return %c0_i32, %c0_i32_0 : i32, i32
  }
  func.func @transform_11(%arg0: i32, %arg1: i32, %arg2: memref<2xi32, #tpu.memory_space<smem>>, %arg3: memref<2xi32, #tpu.memory_space<smem>>, %arg4: memref<2xi32, #tpu.memory_space<smem>>, %arg5: memref<2xi32, #tpu.memory_space<smem>>) -> (i32, i32) {
    %c0_i32 = arith.constant 0 : i32
    %c0_i32_0 = arith.constant 0 : i32
    %c0_i32_1 = arith.constant 0 : i32
    return %c0_i32, %c0_i32_0 : i32, i32
  }
  func.func @transform_12(%arg0: i32, %arg1: i32, %arg2: memref<2xi32, #tpu.memory_space<smem>>, %arg3: memref<2xi32, #tpu.memory_space<smem>>, %arg4: memref<2xi32, #tpu.memory_space<smem>>, %arg5: memref<2xi32, #tpu.memory_space<smem>>) -> (i32, i32) {
    %c0_i32 = arith.constant 0 : i32
    %c0_i32_0 = arith.constant 0 : i32
    %c0_i32_1 = arith.constant 0 : i32
    return %c0_i32, %c0_i32_0 : i32, i32
  }
  func.func @transform_13(%arg0: i32, %arg1: i32, %arg2: memref<2xi32, #tpu.memory_space<smem>>, %arg3: memref<2xi32, #tpu.memory_space<smem>>, %arg4: memref<2xi32, #tpu.memory_space<smem>>, %arg5: memref<2xi32, #tpu.memory_space<smem>>) -> (i32, i32) {
    %c0_i32 = arith.constant 0 : i32
    %c0_i32_0 = arith.constant 0 : i32
    %c0_i32_1 = arith.constant 0 : i32
    return %c0_i32, %c0_i32_0 : i32, i32
  }
  func.func @transform_14(%arg0: i32, %arg1: i32, %arg2: memref<2xi32, #tpu.memory_space<smem>>, %arg3: memref<2xi32, #tpu.memory_space<smem>>, %arg4: memref<2xi32, #tpu.memory_space<smem>>, %arg5: memref<2xi32, #tpu.memory_space<smem>>) -> (i32, i32) {
    %c0_i32 = arith.constant 0 : i32
    %c0_i32_0 = arith.constant 0 : i32
    %c0_i32_1 = arith.constant 0 : i32
    return %c0_i32, %c0_i32_0 : i32, i32
  }
  func.func @transform_15(%arg0: i32, %arg1: i32, %arg2: memref<2xi32, #tpu.memory_space<smem>>, %arg3: memref<2xi32, #tpu.memory_space<smem>>, %arg4: memref<2xi32, #tpu.memory_space<smem>>, %arg5: memref<2xi32, #tpu.memory_space<smem>>) -> (i32, i32) {
    %c0_i32 = arith.constant 0 : i32
    %c0_i32_0 = arith.constant 0 : i32
    %c0_i32_1 = arith.constant 0 : i32
    return %c0_i32, %c0_i32_0 : i32, i32
  }
  func.func @transform_16(%arg0: i32, %arg1: i32, %arg2: memref<2xi32, #tpu.memory_space<smem>>, %arg3: memref<2xi32, #tpu.memory_space<smem>>, %arg4: memref<2xi32, #tpu.memory_space<smem>>, %arg5: memref<2xi32, #tpu.memory_space<smem>>) -> (i32, i32) {
    %c0_i32 = arith.constant 0 : i32
    %c0_i32_0 = arith.constant 0 : i32
    %c0_i32_1 = arith.constant 0 : i32
    return %c0_i32, %c0_i32_0 : i32, i32
  }
  func.func @transform_17(%arg0: i32, %arg1: i32, %arg2: memref<2xi32, #tpu.memory_space<smem>>, %arg3: memref<2xi32, #tpu.memory_space<smem>>, %arg4: memref<2xi32, #tpu.memory_space<smem>>, %arg5: memref<2xi32, #tpu.memory_space<smem>>) -> (i32, i32, i32) {
    %c0_i32 = arith.constant 0 : i32
    %c0_i32_0 = arith.constant 0 : i32
    return %arg0, %arg1, %c0_i32 : i32, i32, i32
  }
  func.func @transform_18(%arg0: i32, %arg1: i32, %arg2: memref<2xi32, #tpu.memory_space<smem>>, %arg3: memref<2xi32, #tpu.memory_space<smem>>, %arg4: memref<2xi32, #tpu.memory_space<smem>>, %arg5: memref<2xi32, #tpu.memory_space<smem>>) -> (i32, i32, i32) {
    %c0_i32 = arith.constant 0 : i32
    %c0_i32_0 = arith.constant 0 : i32
    return %arg0, %arg1, %c0_i32 : i32, i32, i32
  }
  func.func @transform_19(%arg0: i32, %arg1: i32, %arg2: memref<2xi32, #tpu.memory_space<smem>>, %arg3: memref<2xi32, #tpu.memory_space<smem>>, %arg4: memref<2xi32, #tpu.memory_space<smem>>, %arg5: memref<2xi32, #tpu.memory_space<smem>>) -> (i32, i32, i32) {
    %c1_i32 = arith.constant 1 : i32
    %0 = arith.muli %arg0, %c1_i32 : i32
    %1 = arith.addi %0, %arg1 : i32
    %c0_i32 = arith.constant 0 : i32
    %c0_i32_0 = arith.constant 0 : i32
    %c0_i32_1 = arith.constant 0 : i32
    return %1, %c0_i32, %c0_i32_0 : i32, i32, i32
  }
}

</mosaic_0001>

<llo_original>
// kernel: tpu_custom_call.1
$region0: #{tpu_custom_call.1}
  #allocation0 [shape = 'u32[]', space=smem, size = 0x4, offset = 0x4, fixed_abs, tag = 'smem constant byte address 0x4 - core index']
  #allocation1 [shape = 'u32[144,128]{1,0:T(1,128)}', space=vmem, size = 0x12000, scoped, tag = 'internal scratch']
  #allocation2 [shape = 's32[1]{0}', space=sflag, size = 0x4, scoped, tag = 'scoped memory for tpu_custom_call.1']
  #allocation3 [shape = 'u8[512]{0}', space=smem, size = 0x200, scoped, tag = 'prefetched SMEM operand 0']
  #allocation4 [shape = 'u8[512]{0}', space=smem, size = 0x200, scoped, tag = 'prefetched SMEM operand 1']
  #allocation5 [shape = 'u8[512]{0}', space=smem, size = 0x200, scoped, tag = 'prefetched SMEM operand 2']
  #allocation6 [shape = 'u8[512]{0}', space=smem, size = 0x200, scoped, tag = 'prefetched SMEM operand 3']
  %s0 = inlined_call_operand.vmem [shape: s32[2], index: 0, kind: input, shape index: {}]
  %s1 = inlined_call_operand.vmem [shape: s32[2], index: 1, kind: input, shape index: {}]
  %s2 = inlined_call_operand.vmem [shape: s32[2], index: 2, kind: input, shape index: {}]
  %s3 = inlined_call_operand.hbm [shape: s32[2], index: 3, kind: input, shape index: {}]
  %s4 = inlined_call_operand.hbm [shape: bf16[2,16,128], index: 4, kind: input, shape index: {}]
  %s5 = inlined_call_operand.vmem [shape: f32[2,16,1], index: 5, kind: input, shape index: {}]
  %s6 = inlined_call_operand.hbm [shape: f32[2,16,128], index: 6, kind: input, shape index: {}]
  %s7 = inlined_call_operand.hbm [shape: f32[2,16,128], index: 7, kind: input, shape index: {}]
  %s8 = inlined_call_operand.vmem [shape: f32[4,1,128], index: 8, kind: input, shape index: {}]
  %s9 = inlined_call_operand.vmem [shape: f32[8,1,128], index: 9, kind: input, shape index: {}]
  %s10 = inlined_call_operand.hbm [shape: f32[8], index: 10, kind: input, shape index: {}]
  %s11 = inlined_call_operand.hbm [shape: f32[8], index: 11, kind: input, shape index: {}]
  %s12 = inlined_call_operand.vmem [shape: bf16[128,128], index: 12, kind: input, shape index: {}]
  %s13 = inlined_call_operand.vmem [shape: f32[1,128], index: 13, kind: input, shape index: {}]
  %s14 = inlined_call_operand.vmem [shape: f32[1,128], index: 14, kind: input, shape index: {}]
  %s15 = inlined_call_operand.vmem [shape: f32[1,128], index: 15, kind: input, shape index: {}]
  %s16 = inlined_call_operand.hbm [shape: bf16[128,128], index: 16, kind: input, shape index: {}]
  %s17 = inlined_call_operand.hbm [shape: bf16[128,128], index: 17, kind: input, shape index: {}]
  %s18 = inlined_call_operand.vmem [shape: f32[1,128], index: 18, kind: input, shape index: {}]
  %s19 = inlined_call_operand.hbm [shape: bf16[128,128], index: 19, kind: input, shape index: {}]
  %s20 = inlined_call_operand.vmem [shape: f32[1,128], index: 20, kind: input, shape index: {}]
  %s21 = inlined_call_operand.hbm [shape: bf16[2,16,128], index: 21, kind: output, shape index: {0}]
  %s22 = inlined_call_operand.hbm [shape: bf16[2,16,128], index: 22, kind: output, shape index: {1}]
  %s23 = inlined_call_operand.vmem [shape: f32[2,1,1], index: 23, kind: output, shape index: {2}]
  %24 = xla_tuple %s21, %s22, %s23
  %s25 = sld [smem:[#allocation0]]
  $region149: #{tpu_custom_call.1} parent=0
    _
  %s27 = ssub.s32 1, %s25
  %s28 = scalar_select 0, %s27, %s25
  %s29 = sshll.u32 %s0, 4
  %s30 = int_to_ptr.vmem [resolvable:$true] %s29
  %32 = dma.vmem_to_smem %s30, 16, [#allocation3], [#allocation2]
  %s33 = sshll.u32 %s1, 4
  %s34 = int_to_ptr.vmem [resolvable:$true] %s33
  %36 = dma.vmem_to_smem %s34, 16, [#allocation4], [#allocation2]
  %s37 = sshll.u32 %s2, 4
  %s38 = int_to_ptr.vmem [resolvable:$true] %s37
  %40 = dma.vmem_to_smem %s38, 16, [#allocation5], [#allocation2]
  %42 = dma.hbm_to_smem %s3, 16, [#allocation6], [#allocation2]
  %43 = dma.done [#allocation2], 64
  %44 = sfence
  $region1: #{tpu_custom_call.1} parent=0
    #allocation7 [shape = 'u8[8192]{0}', space=vmem, size = 0x2000, scoped, tag = 'input window, operand 4']
    #allocation8 [shape = 's32[2]{0}', space=sflag, size = 0x8, scoped, tag = 'scoped memory for tpu_custom_call.1']
    #allocation9 [shape = 's32[2]{0}', space=sflag, size = 0x8, scoped, tag = 'scoped memory for tpu_custom_call.1']
    #allocation10 [shape = 's32[2]{0}', space=sflag, size = 0x8, scoped, tag = 'scoped memory for tpu_custom_call.1']
    #allocation11 [shape = 'u8[16384]{0}', space=vmem, size = 0x4000, scoped, tag = 'input window, operand 6']
    #allocation12 [shape = 's32[2]{0}', space=sflag, size = 0x8, scoped, tag = 'scoped memory for tpu_custom_call.1']
    #allocation13 [shape = 'u8[16384]{0}', space=vmem, size = 0x4000, scoped, tag = 'input window, operand 7']
    #allocation14 [shape = 'u8[512]{0}', space=smem, size = 0x200, scoped, tag = 'input window, operand 10, single buffered']
    #allocation15 [shape = 'u8[512]{0}', space=smem, size = 0x200, scoped, tag = 'input window, operand 11, single buffered']
    #allocation16 [shape = 's32[1]{0}', space=sflag, size = 0x4, scoped, tag = 'scoped memory for tpu_custom_call.1']
    #allocation17 [shape = 'u8[32768]{0}', space=vmem, size = 0x8000, scoped, tag = 'input window, operand 16, single buffered']
    #allocation18 [shape = 's32[1]{0}', space=sflag, size = 0x4, scoped, tag = 'scoped memory for tpu_custom_call.1']
    #allocation19 [shape = 'u8[32768]{0}', space=vmem, size = 0x8000, scoped, tag = 'input window, operand 17, single buffered']
    #allocation20 [shape = 'u8[32768]{0}', space=vmem, size = 0x8000, scoped, tag = 'input window, operand 19, single buffered']
    #allocation21 [shape = 's32[1]{0}', space=sflag, size = 0x4, scoped, tag = 'scoped memory for tpu_custom_call.1']
    #allocation22 [shape = 'u8[8192]{0}', space=vmem, size = 0x2000, scoped, tag = 'output window, operand 0']
    #allocation23 [shape = 'u8[8192]{0}', space=vmem, size = 0x2000, scoped, tag = 'output window, operand 1']
    #allocation24 [shape = 's32[2]{0}', space=sflag, size = 0x8, scoped, tag = 'scoped memory for tpu_custom_call.1']
    %45 = vsyncpa [#allocation8], 0
    %s46 = scalar_lea.sflag [#allocation8], 1
    %47 = vsyncpa %s46, 0
    %48 = vsyncpa [#allocation12], 0
    %s49 = scalar_lea.sflag [#allocation12], 1
    %50 = vsyncpa %s49, 0
    %51 = vsyncpa [#allocation10], 0
    %52 = vsyncpa [#allocation16], 0
    %53 = vsyncpa [#allocation18], 0
    %54 = vsyncpa [#allocation21], 0
    %55 = vsyncpa [#allocation9], 0
    %s56 = scalar_lea.sflag [#allocation9], 1
    %57 = vsyncpa %s56, 0
    %58 = vsyncpa [#allocation24], 0
    %s59 = scalar_lea.sflag [#allocation24], 1
    %60 = vsyncpa %s59, 0
    loop: start=0, step=1, limit=4
    $region2: #{tpu_custom_call.1} parent=1 // loop_pre_header
      _
    $region3: #{tpu_custom_call.1} parent=1 // loop_header
      %s62 = sphi 0, %s66
      %p63 = scmp.ge.s32.totalorder %s62, 4
      %s69 = sphi 0, %s81
      %s70 = sphi 0, %s77
      %s71 = sphi 0, %s69
      %s72 = sphi 0, %s70
      %s73 = sphi 0, %s71
      %s74 = sphi 0, %s72
      %s86 = sphi 0, %s88
      %s89 = sphi 0, %s86
      %s90 = sphi 0, %s89
      %s106 = sphi 0, %s90
      %s114 = sphi 0, %s116
      %s117 = sphi 0, %s114
      %s118 = sphi 0, %s117
      %s134 = sphi 0, %s118
      %s142 = sphi 0, %s144
      %s145 = sphi 0, %s142
      %s146 = sphi 0, %s145
      %s162 = sphi 0, %s146
      %s170 = sphi 0, %s172
      %s173 = sphi 0, %s170
      %s174 = sphi 0, %s173
      %s190 = sphi 0, %s174
      %s198 = sphi 0, %s200
      %s201 = sphi 0, %s198
      %s202 = sphi 0, %s201
      %s218 = sphi 0, %s202
      %s226 = sphi 0, %s228
      %s229 = sphi 0, %s226
      %s230 = sphi 0, %s229
      %s246 = sphi 0, %s230
      %s250 = sphi 0, %s250
      %s252 = sphi 0, %s250
      %s253 = sphi 0, %s252
      %s267 = sphi 0, %s253
      %s271 = sphi 0, %s271
      %s273 = sphi 0, %s271
      %s274 = sphi 0, %s273
      %s288 = sphi 0, %s274
      %s292 = sphi 0, %s292
      %s294 = sphi 0, %s292
      %s295 = sphi 0, %s294
      %s309 = sphi 0, %s295
      %s313 = sphi 0, %s313
      %s315 = sphi 0, %s313
      %s316 = sphi 0, %s315
      %s330 = sphi 0, %s316
      %s334 = sphi 0, %s334
      %s336 = sphi 0, %s334
      %s337 = sphi 0, %s336
      %s351 = sphi 0, %s337
      %s355 = sphi 0, %s355
      %s357 = sphi 0, %s355
      %s358 = sphi 0, %s357
      %s372 = sphi 0, %s358
      %s376 = sphi 0, %s376
      %s378 = sphi 0, %s376
      %s379 = sphi 0, %s378
      %s393 = sphi 0, %s379
      %s397 = sphi 0, %s397
      %s399 = sphi 0, %s397
      %s400 = sphi 0, %s399
      %s414 = sphi 0, %s400
      %s418 = sphi 0, %s418
      %s420 = sphi 0, %s418
      %s421 = sphi 0, %s420
      %s435 = sphi 0, %s421
      %s439 = sphi 0, %s439
      %s441 = sphi 0, %s439
      %s442 = sphi 0, %s441
      %s456 = sphi 0, %s442
      %s460 = sphi 0, %s460
      %s462 = sphi 0, %s460
      %s463 = sphi 0, %s462
      %s477 = sphi 0, %s463
      %s485 = sphi 0, %s487
      %s488 = sphi 0, %s485
      %s489 = sphi 0, %s488
      %s505 = sphi 0, %s489
      %s513 = sphi 0, %s515
      %s516 = sphi 0, %s513
      %s517 = sphi 0, %s516
      %s533 = sphi 0, %s517
      %s541 = sphi 0, %s543
      %s544 = sphi 0, %s541
      %s545 = sphi 0, %s544
      %s561 = sphi 0, %s545
    $region4: #{tpu_custom_call.1} parent=1 // loop_header_branch
      %65 = sbr.rel (%p63) target = $region8
    $region5: #{tpu_custom_call.1} parent=1 // loop_body
      %s67 = ssub.s32 %s62, 1
      %s68 = ssub.s32 %s62, 2
      %s75 = sadd.s32 1, %s70
      %p76 = scmp.ge.s32.totalorder %s75, 1
      %s77 = scalar_select %p76, 0, %s75
      %s78 = sadd.s32 1, %s69
      %s79 = scalar_select %p76, %s78, %s69
      %p80 = scmp.ge.s32.totalorder %s79, 2
      %s81 = scalar_select %p80, 0, %s79
      %s82 = ssub.s32 %s69, %s81
      %s83 = ssub.s32 %s70, %s77
      %s84 = sor.u32 %s82, %s83
      %p85 = scmp.eq.s32.totalorder %s84, 0
      %s87 = sadd.s32 %s86, 1
      %s88 = scalar_select %p85, %s86, %s87
      %p91 = pneg %p85
      %p92 = scmp.eq.s32.totalorder %s62, 1
      %p93 = por %p91, %p92
      %p94 = scmp.ne.s32.totalorder %s86, %s89
      %p95 = scmp.eq.s32.totalorder %s62, 0
      %p96 = por %p94, %p95
      %p97 = scmp.ne.s32.totalorder %s86, %s89
      %p98 = scmp.eq.s32.totalorder %s67, 1
      %p99 = por %p97, %p98
      %p100 = scmp.ne.s32.totalorder %s89, %s90
      %p101 = scmp.eq.s32.totalorder %s67, 0
      %p102 = por %p100, %p101
      %p103 = scmp.ne.s32.totalorder %s89, %s90
      %p104 = scmp.eq.s32.totalorder %s68, 1
      %p105 = por %p103, %p104
      %p107 = scmp.ne.s32.totalorder %s90, %s106
      %p108 = scmp.eq.s32.totalorder %s68, 0
      %p109 = por %p107, %p108
      %s110 = ssub.s32 %s69, %s81
      %s111 = ssub.s32 %s70, %s77
      %s112 = sor.u32 %s110, %s111
      %p113 = scmp.eq.s32.totalorder %s112, 0
      %s115 = sadd.s32 %s114, 1
      %s116 = scalar_select %p113, %s114, %s115
      %p119 = pneg %p113
      %p120 = scmp.eq.s32.totalorder %s62, 1
      %p121 = por %p119, %p120
      %p122 = scmp.ne.s32.totalorder %s114, %s117
      %p123 = scmp.eq.s32.totalorder %s62, 0
      %p124 = por %p122, %p123
      %p125 = scmp.ne.s32.totalorder %s114, %s117
      %p126 = scmp.eq.s32.totalorder %s67, 1
      %p127 = por %p125, %p126
      %p128 = scmp.ne.s32.totalorder %s117, %s118
      %p129 = scmp.eq.s32.totalorder %s67, 0
      %p130 = por %p128, %p129
      %p131 = scmp.ne.s32.totalorder %s117, %s118
      %p132 = scmp.eq.s32.totalorder %s68, 1
      %p133 = por %p131, %p132
      %p135 = scmp.ne.s32.totalorder %s118, %s134
      %p136 = scmp.eq.s32.totalorder %s68, 0
      %p137 = por %p135, %p136
      %s138 = ssub.s32 %s69, %s81
      %s139 = ssub.s32 %s70, %s77
      %s140 = sor.u32 %s138, %s139
      %p141 = scmp.eq.s32.totalorder %s140, 0
      %s143 = sadd.s32 %s142, 1
      %s144 = scalar_select %p141, %s142, %s143
      %p147 = pneg %p141
      %p148 = scmp.eq.s32.totalorder %s62, 1
      %p149 = por %p147, %p148
      %p150 = scmp.ne.s32.totalorder %s142, %s145
      %p151 = scmp.eq.s32.totalorder %s62, 0
      %p152 = por %p150, %p151
      %p153 = scmp.ne.s32.totalorder %s142, %s145
      %p154 = scmp.eq.s32.totalorder %s67, 1
      %p155 = por %p153, %p154
      %p156 = scmp.ne.s32.totalorder %s145, %s146
      %p157 = scmp.eq.s32.totalorder %s67, 0
      %p158 = por %p156, %p157
      %p159 = scmp.ne.s32.totalorder %s145, %s146
      %p160 = scmp.eq.s32.totalorder %s68, 1
      %p161 = por %p159, %p160
      %p163 = scmp.ne.s32.totalorder %s146, %s162
      %p164 = scmp.eq.s32.totalorder %s68, 0
      %p165 = por %p163, %p164
      %s166 = ssub.s32 %s69, %s81
      %s167 = ssub.s32 %s70, %s77
      %s168 = sor.u32 %s166, %s167
      %p169 = scmp.eq.s32.totalorder %s168, 0
      %s171 = sadd.s32 %s170, 1
      %s172 = scalar_select %p169, %s170, %s171
      %p175 = pneg %p169
      %p176 = scmp.eq.s32.totalorder %s62, 1
      %p177 = por %p175, %p176
      %p178 = scmp.ne.s32.totalorder %s170, %s173
      %p179 = scmp.eq.s32.totalorder %s62, 0
      %p180 = por %p178, %p179
      %p181 = scmp.ne.s32.totalorder %s170, %s173
      %p182 = scmp.eq.s32.totalorder %s67, 1
      %p183 = por %p181, %p182
      %p184 = scmp.ne.s32.totalorder %s173, %s174
      %p185 = scmp.eq.s32.totalorder %s67, 0
      %p186 = por %p184, %p185
      %p187 = scmp.ne.s32.totalorder %s173, %s174
      %p188 = scmp.eq.s32.totalorder %s68, 1
      %p189 = por %p187, %p188
      %p191 = scmp.ne.s32.totalorder %s174, %s190
      %p192 = scmp.eq.s32.totalorder %s68, 0
      %p193 = por %p191, %p192
      %s194 = sld [smem:[#allocation3 + %s69]]
      %s195 = sld [smem:[#allocation3 + %s81]]
      %s196 = ssub.s32 %s194, %s195
      %p197 = scmp.eq.s32.totalorder %s196, 0
      %s199 = sadd.s32 %s198, 1
      %s200 = scalar_select %p197, %s198, %s199
      %p203 = pneg %p197
      %p204 = scmp.eq.s32.totalorder %s62, 1
      %p205 = por %p203, %p204
      %p206 = scmp.ne.s32.totalorder %s198, %s201
      %p207 = scmp.eq.s32.totalorder %s62, 0
      %p208 = por %p206, %p207
      %p209 = scmp.ne.s32.totalorder %s198, %s201
      %p210 = scmp.eq.s32.totalorder %s67, 1
      %p211 = por %p209, %p210
      %p212 = scmp.ne.s32.totalorder %s201, %s202
      %p213 = scmp.eq.s32.totalorder %s67, 0
      %p214 = por %p212, %p213
      %p215 = scmp.ne.s32.totalorder %s201, %s202
      %p216 = scmp.eq.s32.totalorder %s68, 1
      %p217 = por %p215, %p216
      %p219 = scmp.ne.s32.totalorder %s202, %s218
      %p220 = scmp.eq.s32.totalorder %s68, 0
      %p221 = por %p219, %p220
      %s222 = sld [smem:[#allocation6 + %s69]]
      %s223 = sld [smem:[#allocation6 + %s81]]
      %s224 = ssub.s32 %s222, %s223
      %p225 = scmp.eq.s32.totalorder %s224, 0
      %s227 = sadd.s32 %s226, 1
      %s228 = scalar_select %p225, %s226, %s227
      %p231 = pneg %p225
      %p232 = scmp.eq.s32.totalorder %s62, 1
      %p233 = por %p231, %p232
      %p234 = scmp.ne.s32.totalorder %s226, %s229
      %p235 = scmp.eq.s32.totalorder %s62, 0
      %p236 = por %p234, %p235
      %p237 = scmp.ne.s32.totalorder %s226, %s229
      %p238 = scmp.eq.s32.totalorder %s67, 1
      %p239 = por %p237, %p238
      %p240 = scmp.ne.s32.totalorder %s229, %s230
      %p241 = scmp.eq.s32.totalorder %s67, 0
      %p242 = por %p240, %p241
      %p243 = scmp.ne.s32.totalorder %s229, %s230
      %p244 = scmp.eq.s32.totalorder %s68, 1
      %p245 = por %p243, %p244
      %p247 = scmp.ne.s32.totalorder %s230, %s246
      %p248 = scmp.eq.s32.totalorder %s68, 0
      %p249 = por %p247, %p248
      %s251 = sadd.s32 %s250, 1
      %p254 = scmp.eq.s32.totalorder %s62, 1
      %p255 = scmp.ne.s32.totalorder %s250, %s252
      %p256 = scmp.eq.s32.totalorder %s62, 0
      %p257 = por %p255, %p256
      %p258 = scmp.ne.s32.totalorder %s250, %s252
      %p259 = scmp.eq.s32.totalorder %s67, 1
      %p260 = por %p258, %p259
      %p261 = scmp.ne.s32.totalorder %s252, %s253
      %p262 = scmp.eq.s32.totalorder %s67, 0
      %p263 = por %p261, %p262
      %p264 = scmp.ne.s32.totalorder %s252, %s253
      %p265 = scmp.eq.s32.totalorder %s68, 1
      %p266 = por %p264, %p265
      %p268 = scmp.ne.s32.totalorder %s253, %s267
      %p269 = scmp.eq.s32.totalorder %s68, 0
      %p270 = por %p268, %p269
      %s272 = sadd.s32 %s271, 1
      %p275 = scmp.eq.s32.totalorder %s62, 1
      %p276 = scmp.ne.s32.totalorder %s271, %s273
      %p277 = scmp.eq.s32.totalorder %s62, 0
      %p278 = por %p276, %p277
      %p279 = scmp.ne.s32.totalorder %s271, %s273
      %p280 = scmp.eq.s32.totalorder %s67, 1
      %p281 = por %p279, %p280
      %p282 = scmp.ne.s32.totalorder %s273, %s274
      %p283 = scmp.eq.s32.totalorder %s67, 0
      %p284 = por %p282, %p283
      %p285 = scmp.ne.s32.totalorder %s273, %s274
      %p286 = scmp.eq.s32.totalorder %s68, 1
      %p287 = por %p285, %p286
      %p289 = scmp.ne.s32.totalorder %s274, %s288
      %p290 = scmp.eq.s32.totalorder %s68, 0
      %p291 = por %p289, %p290
      %s293 = sadd.s32 %s292, 1
      %p296 = scmp.eq.s32.totalorder %s62, 1
      %p297 = scmp.ne.s32.totalorder %s292, %s294
      %p298 = scmp.eq.s32.totalorder %s62, 0
      %p299 = por %p297, %p298
      %p300 = scmp.ne.s32.totalorder %s292, %s294
      %p301 = scmp.eq.s32.totalorder %s67, 1
      %p302 = por %p300, %p301
      %p303 = scmp.ne.s32.totalorder %s294, %s295
      %p304 = scmp.eq.s32.totalorder %s67, 0
      %p305 = por %p303, %p304
      %p306 = scmp.ne.s32.totalorder %s294, %s295
      %p307 = scmp.eq.s32.totalorder %s68, 1
      %p308 = por %p306, %p307
      %p310 = scmp.ne.s32.totalorder %s295, %s309
      %p311 = scmp.eq.s32.totalorder %s68, 0
      %p312 = por %p310, %p311
      %s314 = sadd.s32 %s313, 1
      %p317 = scmp.eq.s32.totalorder %s62, 1
      %p318 = scmp.ne.s32.totalorder %s313, %s315
      %p319 = scmp.eq.s32.totalorder %s62, 0
      %p320 = por %p318, %p319
      %p321 = scmp.ne.s32.totalorder %s313, %s315
      %p322 = scmp.eq.s32.totalorder %s67, 1
      %p323 = por %p321, %p322
      %p324 = scmp.ne.s32.totalorder %s315, %s316
      %p325 = scmp.eq.s32.totalorder %s67, 0
      %p326 = por %p324, %p325
      %p327 = scmp.ne.s32.totalorder %s315, %s316
      %p328 = scmp.eq.s32.totalorder %s68, 1
      %p329 = por %p327, %p328
      %p331 = scmp.ne.s32.totalorder %s316, %s330
      %p332 = scmp.eq.s32.totalorder %s68, 0
      %p333 = por %p331, %p332
      %s335 = sadd.s32 %s334, 1
      %p338 = scmp.eq.s32.totalorder %s62, 1
      %p339 = scmp.ne.s32.totalorder %s334, %s336
      %p340 = scmp.eq.s32.totalorder %s62, 0
      %p341 = por %p339, %p340
      %p342 = scmp.ne.s32.totalorder %s334, %s336
      %p343 = scmp.eq.s32.totalorder %s67, 1
      %p344 = por %p342, %p343
      %p345 = scmp.ne.s32.totalorder %s336, %s337
      %p346 = scmp.eq.s32.totalorder %s67, 0
      %p347 = por %p345, %p346
      %p348 = scmp.ne.s32.totalorder %s336, %s337
      %p349 = scmp.eq.s32.totalorder %s68, 1
      %p350 = por %p348, %p349
      %p352 = scmp.ne.s32.totalorder %s337, %s351
      %p353 = scmp.eq.s32.totalorder %s68, 0
      %p354 = por %p352, %p353
      %s356 = sadd.s32 %s355, 1
      %p359 = scmp.eq.s32.totalorder %s62, 1
      %p360 = scmp.ne.s32.totalorder %s355, %s357
      %p361 = scmp.eq.s32.totalorder %s62, 0
      %p362 = por %p360, %p361
      %p363 = scmp.ne.s32.totalorder %s355, %s357
      %p364 = scmp.eq.s32.totalorder %s67, 1
      %p365 = por %p363, %p364
      %p366 = scmp.ne.s32.totalorder %s357, %s358
      %p367 = scmp.eq.s32.totalorder %s67, 0
      %p368 = por %p366, %p367
      %p369 = scmp.ne.s32.totalorder %s357, %s358
      %p370 = scmp.eq.s32.totalorder %s68, 1
      %p371 = por %p369, %p370
      %p373 = scmp.ne.s32.totalorder %s358, %s372
      %p374 = scmp.eq.s32.totalorder %s68, 0
      %p375 = por %p373, %p374
      %s377 = sadd.s32 %s376, 1
      %p380 = scmp.eq.s32.totalorder %s62, 1
      %p381 = scmp.ne.s32.totalorder %s376, %s378
      %p382 = scmp.eq.s32.totalorder %s62, 0
      %p383 = por %p381, %p382
      %p384 = scmp.ne.s32.totalorder %s376, %s378
      %p385 = scmp.eq.s32.totalorder %s67, 1
      %p386 = por %p384, %p385
      %p387 = scmp.ne.s32.totalorder %s378, %s379
      %p388 = scmp.eq.s32.totalorder %s67, 0
      %p389 = por %p387, %p388
      %p390 = scmp.ne.s32.totalorder %s378, %s379
      %p391 = scmp.eq.s32.totalorder %s68, 1
      %p392 = por %p390, %p391
      %p394 = scmp.ne.s32.totalorder %s379, %s393
      %p395 = scmp.eq.s32.totalorder %s68, 0
      %p396 = por %p394, %p395
      %s398 = sadd.s32 %s397, 1
      %p401 = scmp.eq.s32.totalorder %s62, 1
      %p402 = scmp.ne.s32.totalorder %s397, %s399
      %p403 = scmp.eq.s32.totalorder %s62, 0
      %p404 = por %p402, %p403
      %p405 = scmp.ne.s32.totalorder %s397, %s399
      %p406 = scmp.eq.s32.totalorder %s67, 1
      %p407 = por %p405, %p406
      %p408 = scmp.ne.s32.totalorder %s399, %s400
      %p409 = scmp.eq.s32.totalorder %s67, 0
      %p410 = por %p408, %p409
      %p411 = scmp.ne.s32.totalorder %s399, %s400
      %p412 = scmp.eq.s32.totalorder %s68, 1
      %p413 = por %p411, %p412
      %p415 = scmp.ne.s32.totalorder %s400, %s414
      %p416 = scmp.eq.s32.totalorder %s68, 0
      %p417 = por %p415, %p416
      %s419 = sadd.s32 %s418, 1
      %p422 = scmp.eq.s32.totalorder %s62, 1
      %p423 = scmp.ne.s32.totalorder %s418, %s420
      %p424 = scmp.eq.s32.totalorder %s62, 0
      %p425 = por %p423, %p424
      %p426 = scmp.ne.s32.totalorder %s418, %s420
      %p427 = scmp.eq.s32.totalorder %s67, 1
      %p428 = por %p426, %p427
      %p429 = scmp.ne.s32.totalorder %s420, %s421
      %p430 = scmp.eq.s32.totalorder %s67, 0
      %p431 = por %p429, %p430
      %p432 = scmp.ne.s32.totalorder %s420, %s421
      %p433 = scmp.eq.s32.totalorder %s68, 1
      %p434 = por %p432, %p433
      %p436 = scmp.ne.s32.totalorder %s421, %s435
      %p437 = scmp.eq.s32.totalorder %s68, 0
      %p438 = por %p436, %p437
      %s440 = sadd.s32 %s439, 1
      %p443 = scmp.eq.s32.totalorder %s62, 1
      %p444 = scmp.ne.s32.totalorder %s439, %s441
      %p445 = scmp.eq.s32.totalorder %s62, 0
      %p446 = por %p444, %p445
      %p447 = scmp.ne.s32.totalorder %s439, %s441
      %p448 = scmp.eq.s32.totalorder %s67, 1
      %p449 = por %p447, %p448
      %p450 = scmp.ne.s32.totalorder %s441, %s442
      %p451 = scmp.eq.s32.totalorder %s67, 0
      %p452 = por %p450, %p451
      %p453 = scmp.ne.s32.totalorder %s441, %s442
      %p454 = scmp.eq.s32.totalorder %s68, 1
      %p455 = por %p453, %p454
      %p457 = scmp.ne.s32.totalorder %s442, %s456
      %p458 = scmp.eq.s32.totalorder %s68, 0
      %p459 = por %p457, %p458
      %s461 = sadd.s32 %s460, 1
      %p464 = scmp.eq.s32.totalorder %s62, 1
      %p465 = scmp.ne.s32.totalorder %s460, %s462
      %p466 = scmp.eq.s32.totalorder %s62, 0
      %p467 = por %p465, %p466
      %p468 = scmp.ne.s32.totalorder %s460, %s462
      %p469 = scmp.eq.s32.totalorder %s67, 1
      %p470 = por %p468, %p469
      %p471 = scmp.ne.s32.totalorder %s462, %s463
      %p472 = scmp.eq.s32.totalorder %s67, 0
      %p473 = por %p471, %p472
      %p474 = scmp.ne.s32.totalorder %s462, %s463
      %p475 = scmp.eq.s32.totalorder %s68, 1
      %p476 = por %p474, %p475
      %p478 = scmp.ne.s32.totalorder %s463, %s477
      %p479 = scmp.eq.s32.totalorder %s68, 0
      %p480 = por %p478, %p479
      %s481 = ssub.s32 %s69, %s81
      %s482 = ssub.s32 %s70, %s77
      %s483 = sor.u32 %s481, %s482
      %p484 = scmp.eq.s32.totalorder %s483, 0
      %s486 = sadd.s32 %s485, 1
      %s487 = scalar_select %p484, %s485, %s486
      %p490 = pneg %p484
      %p491 = scmp.eq.s32.totalorder %s62, 1
      %p492 = por %p490, %p491
      %p493 = scmp.ne.s32.totalorder %s485, %s488
      %p494 = scmp.eq.s32.totalorder %s62, 0
      %p495 = por %p493, %p494
      %p496 = scmp.ne.s32.totalorder %s485, %s488
      %p497 = scmp.eq.s32.totalorder %s67, 1
      %p498 = por %p496, %p497
      %p499 = scmp.ne.s32.totalorder %s488, %s489
      %p500 = scmp.eq.s32.totalorder %s67, 0
      %p501 = por %p499, %p500
      %p502 = scmp.ne.s32.totalorder %s488, %s489
      %p503 = scmp.eq.s32.totalorder %s68, 1
      %p504 = por %p502, %p503
      %p506 = scmp.ne.s32.totalorder %s489, %s505
      %p507 = scmp.eq.s32.totalorder %s68, 0
      %p508 = por %p506, %p507
      %s509 = ssub.s32 %s69, %s81
      %s510 = ssub.s32 %s70, %s77
      %s511 = sor.u32 %s509, %s510
      %p512 = scmp.eq.s32.totalorder %s511, 0
      %s514 = sadd.s32 %s513, 1
      %s515 = scalar_select %p512, %s513, %s514
      %p518 = pneg %p512
      %p519 = scmp.eq.s32.totalorder %s62, 1
      %p520 = por %p518, %p519
      %p521 = scmp.ne.s32.totalorder %s513, %s516
      %p522 = scmp.eq.s32.totalorder %s62, 0
      %p523 = por %p521, %p522
      %p524 = scmp.ne.s32.totalorder %s513, %s516
      %p525 = scmp.eq.s32.totalorder %s67, 1
      %p526 = por %p524, %p525
      %p527 = scmp.ne.s32.totalorder %s516, %s517
      %p528 = scmp.eq.s32.totalorder %s67, 0
      %p529 = por %p527, %p528
      %p530 = scmp.ne.s32.totalorder %s516, %s517
      %p531 = scmp.eq.s32.totalorder %s68, 1
      %p532 = por %p530, %p531
      %p534 = scmp.ne.s32.totalorder %s517, %s533
      %p535 = scmp.eq.s32.totalorder %s68, 0
      %p536 = por %p534, %p535
      %s537 = sadd.s32 %s69, %s70
      %s538 = sadd.s32 %s81, %s77
      %s539 = ssub.s32 %s537, %s538
      %p540 = scmp.eq.s32.totalorder %s539, 0
      %s542 = sadd.s32 %s541, 1
      %s543 = scalar_select %p540, %s541, %s542
      %p546 = pneg %p540
      %p547 = scmp.eq.s32.totalorder %s62, 1
      %p548 = por %p546, %p547
      %p549 = scmp.ne.s32.totalorder %s541, %s544
      %p550 = scmp.eq.s32.totalorder %s62, 0
      %p551 = por %p549, %p550
      %p552 = scmp.ne.s32.totalorder %s541, %s544
      %p553 = scmp.eq.s32.totalorder %s67, 1
      %p554 = por %p552, %p553
      %p555 = scmp.ne.s32.totalorder %s544, %s545
      %p556 = scmp.eq.s32.totalorder %s67, 0
      %p557 = por %p555, %p556
      %p558 = scmp.ne.s32.totalorder %s544, %s545
      %p559 = scmp.eq.s32.totalorder %s68, 1
      %p560 = por %p558, %p559
      %p562 = scmp.ne.s32.totalorder %s545, %s561
      %p563 = scmp.eq.s32.totalorder %s68, 0
      %p564 = por %p562, %p563
      %p565 = scmp.le.s32.totalorder 1, %s62
      %p566 = scmp.lt.s32.totalorder %s62, 3
      %p567 = pnand %p565, %p566
      %p568 = pneg %p567
      // Predicated region
      $region9: #{tpu_custom_call.1} parent=5 // pred_check
        _
      $region10: #{tpu_custom_call.1} parent=5 // pred_check_branch
        %570 = sbr.rel (%p567) target = $region12
      $region11: #{tpu_custom_call.1} parent=5 // pred_region
        %s571 = ssub.s32 %s62, 1
        // Predicated region
        $region13: #{tpu_custom_call.1} parent=11 // pred_check
          %p572 = pneg %p263
        $region14: #{tpu_custom_call.1} parent=11 // pred_check_branch
          %574 = sbr.rel (%p572) target = $region16
        $region15: #{tpu_custom_call.1} parent=11 // pred_region
          %s576 = ssub.s32 16, 16
          %577 = vsyncadd [#allocation10], %s576
          %580 = dma.hbm_to_smem %s10, 16, [#allocation14], [#allocation10]
        $region16: #{tpu_custom_call.1} parent=11 // pred_fallthru
          _
        // Predicated region
        $region17: #{tpu_custom_call.1} parent=11 // pred_check
          %p581 = pneg %p284
        $region18: #{tpu_custom_call.1} parent=11 // pred_check_branch
          %583 = sbr.rel (%p581) target = $region20
        $region19: #{tpu_custom_call.1} parent=11 // pred_region
          %s585 = ssub.s32 16, 16
          %586 = vsyncadd [#allocation16], %s585
          %589 = dma.hbm_to_smem %s11, 16, [#allocation15], [#allocation16]
        $region20: #{tpu_custom_call.1} parent=11 // pred_fallthru
          _
        // Predicated region
        $region21: #{tpu_custom_call.1} parent=11 // pred_check
          %p590 = pneg %p305
        $region22: #{tpu_custom_call.1} parent=11 // pred_check_branch
          %592 = sbr.rel (%p590) target = $region24
        $region23: #{tpu_custom_call.1} parent=11 // pred_region
          _
        $region24: #{tpu_custom_call.1} parent=11 // pred_fallthru
          _
        // Predicated region
        $region25: #{tpu_custom_call.1} parent=11 // pred_check
          %p593 = pneg %p326
        $region26: #{tpu_custom_call.1} parent=11 // pred_check_branch
          %595 = sbr.rel (%p593) target = $region28
        $region27: #{tpu_custom_call.1} parent=11 // pred_region
          _
        $region28: #{tpu_custom_call.1} parent=11 // pred_fallthru
          _
        // Predicated region
        $region29: #{tpu_custom_call.1} parent=11 // pred_check
          %p596 = pneg %p347
        $region30: #{tpu_custom_call.1} parent=11 // pred_check_branch
          %598 = sbr.rel (%p596) target = $region32
        $region31: #{tpu_custom_call.1} parent=11 // pred_region
          _
        $region32: #{tpu_custom_call.1} parent=11 // pred_fallthru
          _
        // Predicated region
        $region33: #{tpu_custom_call.1} parent=11 // pred_check
          %p599 = pneg %p368
        $region34: #{tpu_custom_call.1} parent=11 // pred_check_branch
          %601 = sbr.rel (%p599) target = $region36
        $region35: #{tpu_custom_call.1} parent=11 // pred_region
          _
        $region36: #{tpu_custom_call.1} parent=11 // pred_fallthru
          _
        // Predicated region
        $region37: #{tpu_custom_call.1} parent=11 // pred_check
          %p602 = pneg %p389
        $region38: #{tpu_custom_call.1} parent=11 // pred_check_branch
          %604 = sbr.rel (%p602) target = $region40
        $region39: #{tpu_custom_call.1} parent=11 // pred_region
          %s606 = ssub.s32 1024, 1024
          %607 = vsyncadd [#allocation18], %s606
          %s608 = sshll.u32 [#allocation17], 4
          %s609 = int_to_ptr.vmem [resolvable:$true] %s608
          %614 = dma.hbm_to_vmem [thread:$0]  %s16, 1024, %s609, [#allocation18], 64, 64, 4
        $region40: #{tpu_custom_call.1} parent=11 // pred_fallthru
          _
        // Predicated region
        $region41: #{tpu_custom_call.1} parent=11 // pred_check
          %p615 = pneg %p410
        $region42: #{tpu_custom_call.1} parent=11 // pred_check_branch
          %617 = sbr.rel (%p615) target = $region44
        $region43: #{tpu_custom_call.1} parent=11 // pred_region
          %s619 = ssub.s32 1024, 1024
          %620 = vsyncadd [#allocation18], %s619
          %s621 = sshll.u32 [#allocation19], 4
          %s622 = int_to_ptr.vmem [resolvable:$true] %s621
          %627 = dma.hbm_to_vmem [thread:$0]  %s17, 1024, %s622, [#allocation18], 64, 64, 4
        $region44: #{tpu_custom_call.1} parent=11 // pred_fallthru
          _
        // Predicated region
        $region45: #{tpu_custom_call.1} parent=11 // pred_check
          %p628 = pneg %p431
        $region46: #{tpu_custom_call.1} parent=11 // pred_check_branch
          %630 = sbr.rel (%p628) target = $region48
        $region47: #{tpu_custom_call.1} parent=11 // pred_region
          _
        $region48: #{tpu_custom_call.1} parent=11 // pred_fallthru
          _
        // Predicated region
        $region49: #{tpu_custom_call.1} parent=11 // pred_check
          %p631 = pneg %p452
        $region50: #{tpu_custom_call.1} parent=11 // pred_check_branch
          %633 = sbr.rel (%p631) target = $region52
        $region51: #{tpu_custom_call.1} parent=11 // pred_region
          %s635 = ssub.s32 1024, 1024
          %636 = vsyncadd [#allocation21], %s635
          %s637 = sshll.u32 [#allocation20], 4
          %s638 = int_to_ptr.vmem [resolvable:$true] %s637
          %643 = dma.hbm_to_vmem [thread:$0]  %s19, 1024, %s638, [#allocation21], 64, 64, 4
        $region52: #{tpu_custom_call.1} parent=11 // pred_fallthru
          _
        // Predicated region
        $region53: #{tpu_custom_call.1} parent=11 // pred_check
          %p644 = pneg %p473
        $region54: #{tpu_custom_call.1} parent=11 // pred_check_branch
          %646 = sbr.rel (%p644) target = $region56
        $region55: #{tpu_custom_call.1} parent=11 // pred_region
          _
        $region56: #{tpu_custom_call.1} parent=11 // pred_fallthru
          _
      $region12: #{tpu_custom_call.1} parent=5 // pred_fallthru
        _
      %p647 = scmp.lt.s32.totalorder %s62, 2
      // Predicated region
      $region57: #{tpu_custom_call.1} parent=5 // pred_check
        %p648 = pneg %p647
      $region58: #{tpu_custom_call.1} parent=5 // pred_check_branch
        %650 = sbr.rel (%p648) target = $region60
      $region59: #{tpu_custom_call.1} parent=5 // pred_region
        // Predicated region
        $region61: #{tpu_custom_call.1} parent=59 // pred_check
          %p651 = pneg %p96
        $region62: #{tpu_custom_call.1} parent=59 // pred_check_branch
          %653 = sbr.rel (%p651) target = $region64
        $region63: #{tpu_custom_call.1} parent=59 // pred_region
          %s654 = sand.u32 %s86, 1
          %s655 = scalar_lea.sflag [#allocation8], %s654
          %s656 = sand.u32 %s86, 1
          %s657 = smul.addr %s656, 8
          %s658 = scalar_lea.vmem [#allocation7], %s657
          %s659 = smul.u32 2, %s70
          %s661 = ssub.s32 128, 128
          %662 = vsyncadd %s655, %s661
          %s663 = smul.addr %s69, 2
          %s664 = sadd.s32 %s659, %s663
          %s665 = smul.addr %s664, 64
          %s666 = scalar_lea.hbm %s4, %s665
          %s667 = sshll.u32 %s658, 4
          %s668 = int_to_ptr.vmem [resolvable:$true] %s667
          %673 = dma.hbm_to_vmem [thread:$0]  %s666, 128, %s668, %s655, 64, 64, 4
        $region64: #{tpu_custom_call.1} parent=59 // pred_fallthru
          _
        // Predicated region
        $region65: #{tpu_custom_call.1} parent=59 // pred_check
          %p674 = pneg %p124
        $region66: #{tpu_custom_call.1} parent=59 // pred_check_branch
          %676 = sbr.rel (%p674) target = $region68
        $region67: #{tpu_custom_call.1} parent=59 // pred_region
          %s677 = smul.u32 2, %s70
          %p678 = scmp.lt.s32.totalorder %s69, 1
          %s679 = scalar_select %p678, %s69, 1
          %p680 = scmp.lt.s32.totalorder %s677, 1
          %s681 = scalar_select %p680, %s677, 1
          %s682 = smul.addr %s679, 2
          %s683 = sadd.s32 %s681, %s682
          %s684 = smul.addr %s683, 8
          %s685 = scalar_lea.vmem %s5, %s684
          %s686 = smul.u32 2, %s70
        $region68: #{tpu_custom_call.1} parent=59 // pred_fallthru
          _
        // Predicated region
        $region69: #{tpu_custom_call.1} parent=59 // pred_check
          %p687 = pneg %p152
        $region70: #{tpu_custom_call.1} parent=59 // pred_check_branch
          %689 = sbr.rel (%p687) target = $region72
        $region71: #{tpu_custom_call.1} parent=59 // pred_region
          %s690 = sand.u32 %s62, 1
          %s691 = scalar_lea.sflag [#allocation12], %s690
          %s692 = sand.u32 %s142, 1
          %s693 = smul.addr %s692, 16
          %s694 = scalar_lea.vmem [#allocation11], %s693
          %s695 = smul.u32 2, %s70
          %s697 = ssub.s32 256, 256
          %698 = vsyncadd %s691, %s697
          %s699 = smul.addr %s69, 2
          %s700 = sadd.s32 %s695, %s699
          %s701 = smul.addr %s700, 128
          %s702 = scalar_lea.hbm %s6, %s701
          %s703 = sshll.u32 %s694, 4
          %s704 = int_to_ptr.vmem [resolvable:$true] %s703
          %709 = dma.hbm_to_vmem [thread:$0]  %s702, 256, %s704, %s691, 128, 128, 8
        $region72: #{tpu_custom_call.1} parent=59 // pred_fallthru
          _
        // Predicated region
        $region73: #{tpu_custom_call.1} parent=59 // pred_check
          %p710 = pneg %p180
        $region74: #{tpu_custom_call.1} parent=59 // pred_check_branch
          %712 = sbr.rel (%p710) target = $region76
        $region75: #{tpu_custom_call.1} parent=59 // pred_region
          %s713 = sand.u32 %s62, 1
          %s714 = scalar_lea.sflag [#allocation12], %s713
          %s715 = sand.u32 %s170, 1
          %s716 = smul.addr %s715, 16
          %s717 = scalar_lea.vmem [#allocation13], %s716
          %s718 = smul.u32 2, %s70
          %s720 = ssub.s32 256, 256
          %721 = vsyncadd %s714, %s720
          %s722 = smul.addr %s69, 2
          %s723 = sadd.s32 %s718, %s722
          %s724 = smul.addr %s723, 128
          %s725 = scalar_lea.hbm %s7, %s724
          %s726 = sshll.u32 %s717, 4
          %s727 = int_to_ptr.vmem [resolvable:$true] %s726
          %732 = dma.hbm_to_vmem [thread:$0]  %s725, 256, %s727, %s714, 128, 128, 8
        $region76: #{tpu_custom_call.1} parent=59 // pred_fallthru
          _
        // Predicated region
        $region77: #{tpu_custom_call.1} parent=59 // pred_check
          %p733 = pneg %p208
        $region78: #{tpu_custom_call.1} parent=59 // pred_check_branch
          %735 = sbr.rel (%p733) target = $region80
        $region79: #{tpu_custom_call.1} parent=59 // pred_region
          %s736 = sld [smem:[#allocation3 + %s69]]
          %p737 = scmp.lt.s32.totalorder %s736, 3
          %s738 = scalar_select %p737, %s736, 3
          %s739 = scalar_lea.vmem %s8, %s738
          %s740 = sld [smem:[#allocation3 + %s69]]
        $region80: #{tpu_custom_call.1} parent=59 // pred_fallthru
          _
        // Predicated region
        $region81: #{tpu_custom_call.1} parent=59 // pred_check
          %p741 = pneg %p236
        $region82: #{tpu_custom_call.1} parent=59 // pred_check_branch
          %743 = sbr.rel (%p741) target = $region84
        $region83: #{tpu_custom_call.1} parent=59 // pred_region
          %s744 = sld [smem:[#allocation6 + %s69]]
          %p745 = scmp.lt.s32.totalorder %s744, 7
          %s746 = scalar_select %p745, %s744, 7
          %s747 = scalar_lea.vmem %s9, %s746
          %s748 = sld [smem:[#allocation6 + %s69]]
        $region84: #{tpu_custom_call.1} parent=59 // pred_fallthru
          _
      $region60: #{tpu_custom_call.1} parent=5 // pred_fallthru
        _
      %p749 = scmp.le.s32.totalorder 1, %s62
      %p750 = scmp.lt.s32.totalorder %s62, 3
      %p751 = pnand %p749, %p750
      %p752 = pneg %p751
      // Predicated region
      $region85: #{tpu_custom_call.1} parent=5 // pred_check
        _
      $region86: #{tpu_custom_call.1} parent=5 // pred_check_branch
        %754 = sbr.rel (%p751) target = $region88
      $region87: #{tpu_custom_call.1} parent=5 // pred_region
        %s755 = ssub.s32 %s62, 1
        %s756 = sand.u32 %s89, 1
        %s757 = scalar_lea.sflag [#allocation8], %s756
        %s758 = sand.u32 %s89, 1
        %s759 = smul.addr %s758, 8
        %s760 = scalar_lea.vmem [#allocation7], %s759
        // Predicated region
        $region89: #{tpu_custom_call.1} parent=87 // pred_check
          %p761 = pneg %p102
        $region90: #{tpu_custom_call.1} parent=87 // pred_check_branch
          %763 = sbr.rel (%p761) target = $region92
        $region91: #{tpu_custom_call.1} parent=87 // pred_region
          %764 = dma.done %s757, 128
        $region92: #{tpu_custom_call.1} parent=87 // pred_fallthru
          _
        %s765 = sand.u32 %s67, 1
        %s766 = scalar_lea.sflag [#allocation12], %s765
        %s767 = sand.u32 %s145, 1
        %s768 = smul.addr %s767, 16
        %s769 = scalar_lea.vmem [#allocation11], %s768
        // Predicated region
        $region93: #{tpu_custom_call.1} parent=87 // pred_check
          %p770 = pneg %p158
        $region94: #{tpu_custom_call.1} parent=87 // pred_check_branch
          %772 = sbr.rel (%p770) target = $region96
        $region95: #{tpu_custom_call.1} parent=87 // pred_region
          %773 = dma.done %s766, 256
        $region96: #{tpu_custom_call.1} parent=87 // pred_fallthru
          _
        %s774 = sand.u32 %s67, 1
        %s775 = scalar_lea.sflag [#allocation12], %s774
        %s776 = sand.u32 %s173, 1
        %s777 = smul.addr %s776, 16
        %s778 = scalar_lea.vmem [#allocation13], %s777
        // Predicated region
        $region97: #{tpu_custom_call.1} parent=87 // pred_check
          %p779 = pneg %p186
        $region98: #{tpu_custom_call.1} parent=87 // pred_check_branch
          %781 = sbr.rel (%p779) target = $region100
        $region99: #{tpu_custom_call.1} parent=87 // pred_region
          %782 = dma.done %s775, 256
        $region100: #{tpu_custom_call.1} parent=87 // pred_fallthru
          _
        // Predicated region
        $region101: #{tpu_custom_call.1} parent=87 // pred_check
          %p783 = pneg %p263
        $region102: #{tpu_custom_call.1} parent=87 // pred_check_branch
          %785 = sbr.rel (%p783) target = $region104
        $region103: #{tpu_custom_call.1} parent=87 // pred_region
          %786 = dma.done [#allocation10], 16
        $region104: #{tpu_custom_call.1} parent=87 // pred_fallthru
          _
        // Predicated region
        $region105: #{tpu_custom_call.1} parent=87 // pred_check
          %p787 = pneg %p284
        $region106: #{tpu_custom_call.1} parent=87 // pred_check_branch
          %789 = sbr.rel (%p787) target = $region108
        $region107: #{tpu_custom_call.1} parent=87 // pred_region
          %790 = dma.done [#allocation16], 16
        $region108: #{tpu_custom_call.1} parent=87 // pred_fallthru
          _
        // Predicated region
        $region109: #{tpu_custom_call.1} parent=87 // pred_check
          %p791 = pneg %p389
        $region110: #{tpu_custom_call.1} parent=87 // pred_check_branch
          %793 = sbr.rel (%p791) target = $region112
        $region111: #{tpu_custom_call.1} parent=87 // pred_region
          %794 = dma.done [#allocation18], 1024
        $region112: #{tpu_custom_call.1} parent=87 // pred_fallthru
          _
        // Predicated region
        $region113: #{tpu_custom_call.1} parent=87 // pred_check
          %p795 = pneg %p410
        $region114: #{tpu_custom_call.1} parent=87 // pred_check_branch
          %797 = sbr.rel (%p795) target = $region116
        $region115: #{tpu_custom_call.1} parent=87 // pred_region
          %798 = dma.done [#allocation18], 1024
        $region116: #{tpu_custom_call.1} parent=87 // pred_fallthru
          _
        // Predicated region
        $region117: #{tpu_custom_call.1} parent=87 // pred_check
          %p799 = pneg %p452
        $region118: #{tpu_custom_call.1} parent=87 // pred_check_branch
          %801 = sbr.rel (%p799) target = $region120
        $region119: #{tpu_custom_call.1} parent=87 // pred_region
          %802 = dma.done [#allocation21], 1024
        $region120: #{tpu_custom_call.1} parent=87 // pred_fallthru
          _
        %803 = sfence
        %s804 = sand.u32 %s89, 1
        %s805 = scalar_lea.sflag [#allocation8], %s804
        %s806 = sand.u32 %s89, 1
        %s807 = smul.addr %s806, 8
        %s808 = scalar_lea.vmem [#allocation7], %s807
        %p809 = pneg %p102
        %p810 = pneg %p99
        %s811 = smul.u32 2, %s72
        %p812 = scmp.lt.s32.totalorder %s71, 1
        %s813 = scalar_select %p812, %s71, 1
        %p814 = scmp.lt.s32.totalorder %s811, 1
        %s815 = scalar_select %p814, %s811, 1
        %s816 = smul.addr %s813, 2
        %s817 = sadd.s32 %s815, %s816
        %s818 = smul.addr %s817, 8
        %s819 = scalar_lea.vmem %s5, %s818
        %p820 = pneg %p130
        %p821 = pneg %p127
        %s822 = sand.u32 %s67, 1
        %s823 = scalar_lea.sflag [#allocation12], %s822
        %s824 = sand.u32 %s145, 1
        %s825 = smul.addr %s824, 16
        %s826 = scalar_lea.vmem [#allocation11], %s825
        %p827 = pneg %p158
        %p828 = pneg %p155
        %s829 = sand.u32 %s67, 1
        %s830 = scalar_lea.sflag [#allocation12], %s829
        %s831 = sand.u32 %s173, 1
        %s832 = smul.addr %s831, 16
        %s833 = scalar_lea.vmem [#allocation13], %s832
        %p834 = pneg %p186
        %p835 = pneg %p183
        %s836 = sld [smem:[#allocation3 + %s71]]
        %p837 = scmp.lt.s32.totalorder %s836, 3
        %s838 = scalar_select %p837, %s836, 3
        %s839 = scalar_lea.vmem %s8, %s838
        %p840 = pneg %p214
        %p841 = pneg %p211
        %s842 = sld [smem:[#allocation6 + %s71]]
        %p843 = scmp.lt.s32.totalorder %s842, 7
        %s844 = scalar_select %p843, %s842, 7
        %s845 = scalar_lea.vmem %s9, %s844
        %p846 = pneg %p242
        %p847 = pneg %p239
        %p848 = pneg %p263
        %p849 = pneg %p260
        %p850 = pneg %p284
        %p851 = pneg %p281
        %p852 = pneg %p305
        %p853 = pneg %p302
        %p854 = pneg %p326
        %p855 = pneg %p323
        %p856 = pneg %p347
        %p857 = pneg %p344
        %p858 = pneg %p368
        %p859 = pneg %p365
        %p860 = pneg %p389
        %p861 = pneg %p386
        %p862 = pneg %p410
        %p863 = pneg %p407
        %p864 = pneg %p431
        %p865 = pneg %p428
        %p866 = pneg %p452
        %p867 = pneg %p449
        %p868 = pneg %p473
        %p869 = pneg %p470
        %p870 = pneg %p501
        %p871 = pneg %p498
        %s872 = sand.u32 %s488, 1
        %s873 = scalar_lea.sflag [#allocation9], %s872
        %s874 = sand.u32 %s488, 1
        %s875 = smul.addr %s874, 8
        %s876 = scalar_lea.vmem [#allocation22], %s875
        %p877 = pneg %p529
        %p878 = pneg %p526
        %s879 = sand.u32 %s516, 1
        %s880 = scalar_lea.sflag [#allocation24], %s879
        %s881 = sand.u32 %s516, 1
        %s882 = smul.addr %s881, 8
        %s883 = scalar_lea.vmem [#allocation23], %s882
        %p884 = pneg %p557
        %p885 = pneg %p554
        %s886 = sadd.s32 %s71, %s72
        %p887 = scmp.lt.s32.totalorder %s886, 1
        %s888 = scalar_select %p887, %s886, 1
        %s889 = scalar_lea.vmem %s23, %s888
        %s890 = smul.u32 2, %s72
        %s891 = smul.u32 2, %s72
        %p892 = scmp.lt.s32.totalorder %s71, 1
        %s893 = scalar_select %p892, %s71, 1
        %p894 = scmp.lt.s32.totalorder %s891, 1
        %s895 = scalar_select %p894, %s891, 1
        %s896 = smul.addr %s893, 2
        %s897 = sadd.s32 %s895, %s896
        %s898 = smul.addr %s897, 8
        %s899 = scalar_lea.vmem %s5, %s898
        %s900 = smul.u32 2, %s72
        %s901 = smul.u32 2, %s72
        %s902 = smul.u32 2, %s72
        %s903 = sld [smem:[#allocation3 + %s71]]
        %p904 = scmp.lt.s32.totalorder %s903, 3
        %s905 = scalar_select %p904, %s903, 3
        %s906 = scalar_lea.vmem %s8, %s905
        %s907 = sld [smem:[#allocation3 + %s71]]
        %s908 = sld [smem:[#allocation6 + %s71]]
        %p909 = scmp.lt.s32.totalorder %s908, 7
        %s910 = scalar_select %p909, %s908, 7
        %s911 = scalar_lea.vmem %s9, %s910
        %s912 = sld [smem:[#allocation6 + %s71]]
        %s913 = smul.u32 2, %s72
        %s914 = smul.u32 2, %s72
        %s915 = sadd.s32 %s71, %s72
        %p916 = scmp.lt.s32.totalorder %s915, 1
        %s917 = scalar_select %p916, %s915, 1
        %s918 = scalar_lea.vmem %s23, %s917
        %s919 = sadd.s32 %s71, %s72
        %v921 = vld [vmem:[%s760] sm:$0xf]
        %v922 = vld [vmem:[%s760 + $0x4] sm:$0xf]
        %v923 = vld [vmem:[%s12] sm:$0xf]
        %v924 = vld [vmem:[%s12 + $0x4] sm:$0xf]
        %v925 = vld [vmem:[%s12 + $0x8] sm:$0xf]
        %v926 = vld [vmem:[%s12 + $0xc] sm:$0xf]
        %v927 = vld [vmem:[%s12 + $0x10] sm:$0xf]
        %v928 = vld [vmem:[%s12 + $0x14] sm:$0xf]
        %v929 = vld [vmem:[%s12 + $0x18] sm:$0xf]
        %v930 = vld [vmem:[%s12 + $0x1c] sm:$0xf]
        %v931 = vld [vmem:[%s12 + $0x20] sm:$0xf]
        %v932 = vld [vmem:[%s12 + $0x24] sm:$0xf]
        %v933 = vld [vmem:[%s12 + $0x28] sm:$0xf]
        %v934 = vld [vmem:[%s12 + $0x2c] sm:$0xf]
        %v935 = vld [vmem:[%s12 + $0x30] sm:$0xf]
        %v936 = vld [vmem:[%s12 + $0x34] sm:$0xf]
        %v937 = vld [vmem:[%s12 + $0x38] sm:$0xf]
        %v938 = vld [vmem:[%s12 + $0x3c] sm:$0xf]
        %v939 = vld [vmem:[%s13] sm:$0x1]
        %v941 = vlaneseq
        %v942 = vshrl.u32 %v941, 7
        %v943 = vsub.s32 0, %v942
        %v944 = vrot.slane %v939, %v943
        %v948 = vunpack.c.l.b16 %v921
        %v949 = vunpack.c.l.b16 %v922
        %v950 = vpack.c.b16 %v949, %v948
        %v968 = vunpack.c.l.b16 %v923
        %v969 = vunpack.c.l.b16 %v924
        %v970 = vunpack.c.l.b16 %v925
        %v971 = vunpack.c.l.b16 %v926
        %v972 = vunpack.c.l.b16 %v927
        %v973 = vunpack.c.l.b16 %v928
        %v974 = vunpack.c.l.b16 %v929
        %v975 = vunpack.c.l.b16 %v930
        %v976 = vunpack.c.l.b16 %v931
        %v977 = vunpack.c.l.b16 %v932
        %v978 = vunpack.c.l.b16 %v933
        %v979 = vunpack.c.l.b16 %v934
        %v980 = vunpack.c.l.b16 %v935
        %v981 = vunpack.c.l.b16 %v936
        %v982 = vunpack.c.l.b16 %v937
        %v983 = vunpack.c.l.b16 %v938
        %v984 = vpack.c.b16 %v969, %v968
        %v985 = vpack.c.b16 %v971, %v970
        %v986 = vpack.c.b16 %v973, %v972
        %v987 = vpack.c.b16 %v975, %v974
        %v988 = vpack.c.b16 %v977, %v976
        %v989 = vpack.c.b16 %v979, %v978
        %v990 = vpack.c.b16 %v981, %v980
        %v991 = vpack.c.b16 %v983, %v982
        %1000 = vmatprep.subr.bf16.mxu0 0
        %1001 = vmatpush1.bf16.msra.mxu0 %v984
        %1002 = vmatprep.subr.bf16.mxu0 0
        %1003 = vmatpush1.bf16.msra.mxu0 %v985
        %1004 = vmatprep.subr.bf16.mxu0 0
        %1005 = vmatpush1.bf16.msra.mxu0 %v986
        %1006 = vmatprep.subr.bf16.mxu0 0
        %1007 = vmatpush1.bf16.msra.mxu0 %v987
        %1008 = vmatprep.subr.bf16.mxu0 0
        %1009 = vmatpush1.bf16.msra.mxu0 %v988
        %1010 = vmatprep.subr.bf16.mxu0 0
        %1011 = vmatpush1.bf16.msra.mxu0 %v989
        %1012 = vmatprep.subr.bf16.mxu0 0
        %1013 = vmatpush1.bf16.msra.mxu0 %v990
        %1014 = vmatprep.subr.bf16.mxu0 0
        %1015 = vmatpush1.bf16.msra.mxu0 %v991
        %1016 = vmatprep.subr.bf16.mxu0 0
        %1017 = vmatpush1.bf16.msra.mxu0 0
        %1018 = vmatprep.subr.bf16.mxu0 0
        %1019 = vmatpush1.bf16.msra.mxu0 0
        %1020 = vmatprep.subr.bf16.mxu0 0
        %1021 = vmatpush1.bf16.msra.mxu0 0
        %1022 = vmatprep.subr.bf16.mxu0 0
        %1023 = vmatpush1.bf16.msra.mxu0 0
        %1024 = vmatprep.subr.bf16.mxu0 0
        %1025 = vmatpush1.bf16.msra.mxu0 0
        %1026 = vmatprep.subr.bf16.mxu0 0
        %1027 = vmatpush1.bf16.msra.mxu0 0
        %1028 = vmatprep.subr.bf16.mxu0 0
        %1029 = vmatpush1.bf16.msra.mxu0 0
        %1030 = vmatprep.subr.bf16.mxu0 0
        %1031 = vmatpush1.bf16.msra.mxu0 0
        %1032 = vmatprep.mubr.bf16.mxu0 0
        %1033 = vmatmul.mubr.bf16.gmra.mrb[0].mxu0 %v950
        %v1034 = vpop.f32.mrb[0].mxu0
        %v1035 = vadd.f32 %v944, %v1034
        %v1036 = vpop.f32.mrb[0].mxu0
        %v1037 = vpop.f32.mrb[0].mxu0
        %v1038 = vadd.f32 %v944, %v1037
        %v1039 = vpop.f32.mrb[0].mxu0
        %1040 = vdwg.mxu0
        %s1041 = smul.u32 %s72, 16
        %v1042 = vlaneseq
        %v1043 = vshrl.u32 %v1042, 7
        %v1044 = vadd.s32 %v1043, 8
        %v1045 = vstv %s1041
        %v1046 = vadd.s32 %v1045, %v1043
        %v1047 = vadd.s32 %v1045, %v1044
        %s1048 = sld [smem:[#allocation4 + %s71]]
        %v1049 = vstv %s1048
        %vm1050 = vcmp.ge.s32.totalorder %v1046, %v1049
        %vm1051 = vcmp.ge.s32.totalorder %v1047, %v1049
        %v1052 = vsel %vm1050, 1, 0
        %v1053 = vsel %vm1051, 1, 0
        %vm1054 = vcmp.eq.s32.totalorder %v1052, 1
        %vm1055 = vcmp.eq.s32.totalorder %v1053, 1
        %v1056 = vsel %vm1054, 0.0, %v1035
        %v1057 = vsel %vm1055, 0.0, %v1038
        %v1058 = vld [vmem:[%s906] sm:$0x1]
        %v1059 = vld [vmem:[%s899] sm:$0xff]
        %v1060 = vld [vmem:[%s899 + $0x8] sm:$0xff]
        %v1061 = vld [vmem:[%s14] sm:$0x1]
        %1063 = vset.pattern.permute.xlu0 0
        %1064 = vperm.xlu0 %1063, %v1059
        %v1065 = vpop.permute.xlu0 %1064
        %1068 = vset.pattern.permute.xlu0 0
        %1069 = vperm.xlu0 %1068, %v1060
        %v1070 = vpop.permute.xlu0 %1069
        %v1073 = vlaneseq
        %v1074 = vshrl.u32 %v1073, 7
        %v1075 = vsub.s32 0, %v1074
        %v1076 = vrot.slane %v1061, %v1075
        %v1078 = vmul.f32 %v1065, %v1076
        %v1079 = vmul.f32 %v1070, %v1076
        %v1080 = vld [vmem:[%s15] sm:$0x1]
        %v1082 = vlaneseq
        %v1083 = vshrl.u32 %v1082, 7
        %v1084 = vsub.s32 0, %v1083
        %v1085 = vrot.slane %v1080, %v1084
        %v1087 = vadd.f32 %v1078, %v1085
        %v1088 = vadd.f32 %v1079, %v1085
        %v1090 = vlaneseq
        %v1091 = vshrl.u32 %v1090, 7
        %v1092 = vsub.s32 0, %v1091
        %v1093 = vrot.slane %v1058, %v1092
        %v1095 = vadd.f32 %v1056, %v1093
        %v1096 = vadd.f32 %v1057, %v1093
        %v1097 = vadd.f32 %v1095, %v1087
        %v1098 = vadd.f32 %v1096, %v1088
        %v1099 = vpack.c.bf16 %v1098, %v1097
        %v1101 = vunpack.c.l.b16 %v1099
        %v1102 = vunpack.c.h.b16 %v1099
        %v1103 = vpack.c.b16 %v1101, %v1101
        %v1104 = vpack.c.b16 %v1102, %v1102
        %1107 = vst [vmem:[%s876] sm:$0xf] %v1103
        %1108 = vst [vmem:[%s876 + $0x4] sm:$0xf] %v1104
        %s1109 = sld [smem:[#allocation6 + %s71]]
        %s1110 = sld [smem:[#allocation14 + %s1109]]
        %s1111 = sld [smem:[#allocation15 + %s1109]]
        %v1112 = vld [vmem:[%s778] sm:$0xff]
        %v1113 = vld [vmem:[%s778 + $0x8] sm:$0xff]
        %v1114 = vld [vmem:[%s769] sm:$0xff]
        %v1115 = vld [vmem:[%s769 + $0x8] sm:$0xff]
        %v1116 = vstv %s1110
        %v1117 = vmul.f32 %v1116, %v1114
        %v1118 = vmul.f32 %v1116, %v1115
        %v1119 = vstv %s1111
        %v1120 = vmul.f32 %v1119, %v1112
        %v1121 = vmul.f32 %v1119, %v1113
        %v1122 = vadd.f32 %v1117, %v1120
        %v1123 = vadd.f32 %v1118, %v1121
        %v1124 = vpack.c.bf16 %v1123, %v1122
        %v1125 = vld [vmem:[#allocation17] sm:$0xf]
        %v1126 = vld [vmem:[#allocation17 + $0x4] sm:$0xf]
        %v1127 = vld [vmem:[#allocation17 + $0x8] sm:$0xf]
        %v1128 = vld [vmem:[#allocation17 + $0xc] sm:$0xf]
        %v1129 = vld [vmem:[#allocation17 + $0x10] sm:$0xf]
        %v1130 = vld [vmem:[#allocation17 + $0x14] sm:$0xf]
        %v1131 = vld [vmem:[#allocation17 + $0x18] sm:$0xf]
        %v1132 = vld [vmem:[#allocation17 + $0x1c] sm:$0xf]
        %v1133 = vld [vmem:[#allocation17 + $0x20] sm:$0xf]
        %v1134 = vld [vmem:[#allocation17 + $0x24] sm:$0xf]
        %v1135 = vld [vmem:[#allocation17 + $0x28] sm:$0xf]
        %v1136 = vld [vmem:[#allocation17 + $0x2c] sm:$0xf]
        %v1137 = vld [vmem:[#allocation17 + $0x30] sm:$0xf]
        %v1138 = vld [vmem:[#allocation17 + $0x34] sm:$0xf]
        %v1139 = vld [vmem:[#allocation17 + $0x38] sm:$0xf]
        %v1140 = vld [vmem:[#allocation17 + $0x3c] sm:$0xf]
        %v1141 = vld [vmem:[#allocation19] sm:$0xf]
        %v1142 = vld [vmem:[#allocation19 + $0x4] sm:$0xf]
        %v1143 = vld [vmem:[#allocation19 + $0x8] sm:$0xf]
        %v1144 = vld [vmem:[#allocation19 + $0xc] sm:$0xf]
        %v1145 = vld [vmem:[#allocation19 + $0x10] sm:$0xf]
        %v1146 = vld [vmem:[#allocation19 + $0x14] sm:$0xf]
        %v1147 = vld [vmem:[#allocation19 + $0x18] sm:$0xf]
        %v1148 = vld [vmem:[#allocation19 + $0x1c] sm:$0xf]
        %v1149 = vld [vmem:[#allocation19 + $0x20] sm:$0xf]
        %v1150 = vld [vmem:[#allocation19 + $0x24] sm:$0xf]
        %v1151 = vld [vmem:[#allocation19 + $0x28] sm:$0xf]
        %v1152 = vld [vmem:[#allocation19 + $0x2c] sm:$0xf]
        %v1153 = vld [vmem:[#allocation19 + $0x30] sm:$0xf]
        %v1154 = vld [vmem:[#allocation19 + $0x34] sm:$0xf]
        %v1155 = vld [vmem:[#allocation19 + $0x38] sm:$0xf]
        %v1156 = vld [vmem:[#allocation19 + $0x3c] sm:$0xf]
        %v1173 = vunpack.c.l.b16 %v1141
        %v1174 = vunpack.c.l.b16 %v1142
        %v1175 = vunpack.c.l.b16 %v1143
        %v1176 = vunpack.c.l.b16 %v1144
        %v1177 = vunpack.c.l.b16 %v1145
        %v1178 = vunpack.c.l.b16 %v1146
        %v1179 = vunpack.c.l.b16 %v1147
        %v1180 = vunpack.c.l.b16 %v1148
        %v1181 = vunpack.c.l.b16 %v1149
        %v1182 = vunpack.c.l.b16 %v1150
        %v1183 = vunpack.c.l.b16 %v1151
        %v1184 = vunpack.c.l.b16 %v1152
        %v1185 = vunpack.c.l.b16 %v1153
        %v1186 = vunpack.c.l.b16 %v1154
        %v1187 = vunpack.c.l.b16 %v1155
        %v1188 = vunpack.c.l.b16 %v1156
        %v1189 = vpack.c.b16 %v1174, %v1173
        %v1190 = vpack.c.b16 %v1176, %v1175
        %v1191 = vpack.c.b16 %v1178, %v1177
        %v1192 = vpack.c.b16 %v1180, %v1179
        %v1193 = vpack.c.b16 %v1182, %v1181
        %v1194 = vpack.c.b16 %v1184, %v1183
        %v1195 = vpack.c.b16 %v1186, %v1185
        %v1196 = vpack.c.b16 %v1188, %v1187
        %1205 = vmatprep.subr.bf16.mxu0 0
        %1206 = vmatpush1.bf16.msra.mxu0 %v1189
        %1207 = vmatprep.subr.bf16.mxu0 0
        %1208 = vmatpush1.bf16.msra.mxu0 %v1190
        %1209 = vmatprep.subr.bf16.mxu0 0
        %1210 = vmatpush1.bf16.msra.mxu0 %v1191
        %1211 = vmatprep.subr.bf16.mxu0 0
        %1212 = vmatpush1.bf16.msra.mxu0 %v1192
        %1213 = vmatprep.subr.bf16.mxu0 0
        %1214 = vmatpush1.bf16.msra.mxu0 %v1193
        %1215 = vmatprep.subr.bf16.mxu0 0
        %1216 = vmatpush1.bf16.msra.mxu0 %v1194
        %1217 = vmatprep.subr.bf16.mxu0 0
        %1218 = vmatpush1.bf16.msra.mxu0 %v1195
        %1219 = vmatprep.subr.bf16.mxu0 0
        %1220 = vmatpush1.bf16.msra.mxu0 %v1196
        %1221 = vmatprep.subr.bf16.mxu0 0
        %1222 = vmatpush1.bf16.msra.mxu0 0
        %1223 = vmatprep.subr.bf16.mxu0 0
        %1224 = vmatpush1.bf16.msra.mxu0 0
        %1225 = vmatprep.subr.bf16.mxu0 0
        %1226 = vmatpush1.bf16.msra.mxu0 0
        %1227 = vmatprep.subr.bf16.mxu0 0
        %1228 = vmatpush1.bf16.msra.mxu0 0
        %1229 = vmatprep.subr.bf16.mxu0 0
        %1230 = vmatpush1.bf16.msra.mxu0 0
        %1231 = vmatprep.subr.bf16.mxu0 0
        %1232 = vmatpush1.bf16.msra.mxu0 0
        %1233 = vmatprep.subr.bf16.mxu0 0
        %1234 = vmatpush1.bf16.msra.mxu0 0
        %1235 = vmatprep.subr.bf16.mxu0 0
        %1236 = vmatpush1.bf16.msra.mxu0 0
        %1237 = vmatprep.mubr.bf16.mxu0 0
        %1238 = vmatmul.mubr.bf16.gmra.mrb[0].mxu0 %v1099
        %v1239 = vpop.f32.mrb[0].mxu0
        %v1240 = vadd.f32 0.0, %v1239
        %v1241 = vpop.f32.mrb[0].mxu0
        %v1242 = vpop.f32.mrb[0].mxu0
        %v1243 = vadd.f32 0.0, %v1242
        %v1244 = vpop.f32.mrb[0].mxu0
        %1245 = vdwg.mxu0
        %v1262 = vunpack.c.l.b16 %v1125
        %v1263 = vunpack.c.l.b16 %v1126
        %v1264 = vunpack.c.l.b16 %v1127
        %v1265 = vunpack.c.l.b16 %v1128
        %v1266 = vunpack.c.l.b16 %v1129
        %v1267 = vunpack.c.l.b16 %v1130
        %v1268 = vunpack.c.l.b16 %v1131
        %v1269 = vunpack.c.l.b16 %v1132
        %v1270 = vunpack.c.l.b16 %v1133
        %v1271 = vunpack.c.l.b16 %v1134
        %v1272 = vunpack.c.l.b16 %v1135
        %v1273 = vunpack.c.l.b16 %v1136
        %v1274 = vunpack.c.l.b16 %v1137
        %v1275 = vunpack.c.l.b16 %v1138
        %v1276 = vunpack.c.l.b16 %v1139
        %v1277 = vunpack.c.l.b16 %v1140
        %v1278 = vpack.c.b16 %v1263, %v1262
        %v1279 = vpack.c.b16 %v1265, %v1264
        %v1280 = vpack.c.b16 %v1267, %v1266
        %v1281 = vpack.c.b16 %v1269, %v1268
        %v1282 = vpack.c.b16 %v1271, %v1270
        %v1283 = vpack.c.b16 %v1273, %v1272
        %v1284 = vpack.c.b16 %v1275, %v1274
        %v1285 = vpack.c.b16 %v1277, %v1276
        %1294 = vmatprep.subr.bf16.mxu0 0
        %1295 = vmatpush1.bf16.msra.mxu0 %v1278
        %1296 = vmatprep.subr.bf16.mxu0 0
        %1297 = vmatpush1.bf16.msra.mxu0 %v1279
        %1298 = vmatprep.subr.bf16.mxu0 0
        %1299 = vmatpush1.bf16.msra.mxu0 %v1280
        %1300 = vmatprep.subr.bf16.mxu0 0
        %1301 = vmatpush1.bf16.msra.mxu0 %v1281
        %1302 = vmatprep.subr.bf16.mxu0 0
        %1303 = vmatpush1.bf16.msra.mxu0 %v1282
        %1304 = vmatprep.subr.bf16.mxu0 0
        %1305 = vmatpush1.bf16.msra.mxu0 %v1283
        %1306 = vmatprep.subr.bf16.mxu0 0
        %1307 = vmatpush1.bf16.msra.mxu0 %v1284
        %1308 = vmatprep.subr.bf16.mxu0 0
        %1309 = vmatpush1.bf16.msra.mxu0 %v1285
        %1310 = vmatprep.subr.bf16.mxu0 0
        %1311 = vmatpush1.bf16.msra.mxu0 0
        %1312 = vmatprep.subr.bf16.mxu0 0
        %1313 = vmatpush1.bf16.msra.mxu0 0
        %1314 = vmatprep.subr.bf16.mxu0 0
        %1315 = vmatpush1.bf16.msra.mxu0 0
        %1316 = vmatprep.subr.bf16.mxu0 0
        %1317 = vmatpush1.bf16.msra.mxu0 0
        %1318 = vmatprep.subr.bf16.mxu0 0
        %1319 = vmatpush1.bf16.msra.mxu0 0
        %1320 = vmatprep.subr.bf16.mxu0 0
        %1321 = vmatpush1.bf16.msra.mxu0 0
        %1322 = vmatprep.subr.bf16.mxu0 0
        %1323 = vmatpush1.bf16.msra.mxu0 0
        %1324 = vmatprep.subr.bf16.mxu0 0
        %1325 = vmatpush1.bf16.msra.mxu0 0
        %1326 = vmatprep.mubr.bf16.mxu0 0
        %1327 = vmatmul.mubr.bf16.gmra.mrb[0].mxu0 %v1124
        %v1328 = vpop.f32.mrb[0].mxu0
        %v1329 = vadd.f32 %v1240, %v1328
        %v1330 = vpop.f32.mrb[0].mxu0
        %v1331 = vpop.f32.mrb[0].mxu0
        %v1332 = vadd.f32 %v1243, %v1331
        %v1333 = vpop.f32.mrb[0].mxu0
        %1334 = vdwg.mxu0
        %v1335 = vld [vmem:[%s911] sm:$0x1]
        %v1337 = vlaneseq
        %v1338 = vshrl.u32 %v1337, 7
        %v1339 = vsub.s32 0, %v1338
        %v1340 = vrot.slane %v1335, %v1339
        %v1342 = vadd.f32 %v1329, %v1340
        %v1343 = vadd.f32 %v1332, %v1340
        %v1344 = vld [vmem:[%s18] sm:$0x1]
        %v1346 = vlaneseq
        %v1347 = vshrl.u32 %v1346, 7
        %v1348 = vsub.s32 0, %v1347
        %v1349 = vrot.slane %v1344, %v1348
        %v1351 = vadd.f32 %v1342, %v1349
        %v1352 = vadd.f32 %v1343, %v1349
        %v1353 = vmax.f32 %v1351, 0.0
        %v1354 = vmax.f32 %v1352, 0.0
        %v1355 = vpack.c.bf16 %v1354, %v1353
        %v1356 = vld [vmem:[#allocation20] sm:$0xf]
        %v1357 = vld [vmem:[#allocation20 + $0x4] sm:$0xf]
        %v1358 = vld [vmem:[#allocation20 + $0x8] sm:$0xf]
        %v1359 = vld [vmem:[#allocation20 + $0xc] sm:$0xf]
        %v1360 = vld [vmem:[#allocation20 + $0x10] sm:$0xf]
        %v1361 = vld [vmem:[#allocation20 + $0x14] sm:$0xf]
        %v1362 = vld [vmem:[#allocation20 + $0x18] sm:$0xf]
        %v1363 = vld [vmem:[#allocation20 + $0x1c] sm:$0xf]
        %v1364 = vld [vmem:[#allocation20 + $0x20] sm:$0xf]
        %v1365 = vld [vmem:[#allocation20 + $0x24] sm:$0xf]
        %v1366 = vld [vmem:[#allocation20 + $0x28] sm:$0xf]
        %v1367 = vld [vmem:[#allocation20 + $0x2c] sm:$0xf]
        %v1368 = vld [vmem:[#allocation20 + $0x30] sm:$0xf]
        %v1369 = vld [vmem:[#allocation20 + $0x34] sm:$0xf]
        %v1370 = vld [vmem:[#allocation20 + $0x38] sm:$0xf]
        %v1371 = vld [vmem:[#allocation20 + $0x3c] sm:$0xf]
        %v1372 = vld [vmem:[%s20] sm:$0x1]
        %v1374 = vlaneseq
        %v1375 = vshrl.u32 %v1374, 7
        %v1376 = vsub.s32 0, %v1375
        %v1377 = vrot.slane %v1372, %v1376
        %v1395 = vunpack.c.l.b16 %v1356
        %v1396 = vunpack.c.l.b16 %v1357
        %v1397 = vunpack.c.l.b16 %v1358
        %v1398 = vunpack.c.l.b16 %v1359
        %v1399 = vunpack.c.l.b16 %v1360
        %v1400 = vunpack.c.l.b16 %v1361
        %v1401 = vunpack.c.l.b16 %v1362
        %v1402 = vunpack.c.l.b16 %v1363
        %v1403 = vunpack.c.l.b16 %v1364
        %v1404 = vunpack.c.l.b16 %v1365
        %v1405 = vunpack.c.l.b16 %v1366
        %v1406 = vunpack.c.l.b16 %v1367
        %v1407 = vunpack.c.l.b16 %v1368
        %v1408 = vunpack.c.l.b16 %v1369
        %v1409 = vunpack.c.l.b16 %v1370
        %v1410 = vunpack.c.l.b16 %v1371
        %v1411 = vpack.c.b16 %v1396, %v1395
        %v1412 = vpack.c.b16 %v1398, %v1397
        %v1413 = vpack.c.b16 %v1400, %v1399
        %v1414 = vpack.c.b16 %v1402, %v1401
        %v1415 = vpack.c.b16 %v1404, %v1403
        %v1416 = vpack.c.b16 %v1406, %v1405
        %v1417 = vpack.c.b16 %v1408, %v1407
        %v1418 = vpack.c.b16 %v1410, %v1409
        %1427 = vmatprep.subr.bf16.mxu0 0
        %1428 = vmatpush1.bf16.msra.mxu0 %v1411
        %1429 = vmatprep.subr.bf16.mxu0 0
        %1430 = vmatpush1.bf16.msra.mxu0 %v1412
        %1431 = vmatprep.subr.bf16.mxu0 0
        %1432 = vmatpush1.bf16.msra.mxu0 %v1413
        %1433 = vmatprep.subr.bf16.mxu0 0
        %1434 = vmatpush1.bf16.msra.mxu0 %v1414
        %1435 = vmatprep.subr.bf16.mxu0 0
        %1436 = vmatpush1.bf16.msra.mxu0 %v1415
        %1437 = vmatprep.subr.bf16.mxu0 0
        %1438 = vmatpush1.bf16.msra.mxu0 %v1416
        %1439 = vmatprep.subr.bf16.mxu0 0
        %1440 = vmatpush1.bf16.msra.mxu0 %v1417
        %1441 = vmatprep.subr.bf16.mxu0 0
        %1442 = vmatpush1.bf16.msra.mxu0 %v1418
        %1443 = vmatprep.subr.bf16.mxu0 0
        %1444 = vmatpush1.bf16.msra.mxu0 0
        %1445 = vmatprep.subr.bf16.mxu0 0
        %1446 = vmatpush1.bf16.msra.mxu0 0
        %1447 = vmatprep.subr.bf16.mxu0 0
        %1448 = vmatpush1.bf16.msra.mxu0 0
        %1449 = vmatprep.subr.bf16.mxu0 0
        %1450 = vmatpush1.bf16.msra.mxu0 0
        %1451 = vmatprep.subr.bf16.mxu0 0
        %1452 = vmatpush1.bf16.msra.mxu0 0
        %1453 = vmatprep.subr.bf16.mxu0 0
        %1454 = vmatpush1.bf16.msra.mxu0 0
        %1455 = vmatprep.subr.bf16.mxu0 0
        %1456 = vmatpush1.bf16.msra.mxu0 0
        %1457 = vmatprep.subr.bf16.mxu0 0
        %1458 = vmatpush1.bf16.msra.mxu0 0
        %1459 = vmatprep.mubr.bf16.mxu0 0
        %1460 = vmatmul.mubr.bf16.gmra.mrb[0].mxu0 %v1355
        %v1461 = vpop.f32.mrb[0].mxu0
        %v1462 = vadd.f32 %v1377, %v1461
        %v1463 = vpop.f32.mrb[0].mxu0
        %v1464 = vpop.f32.mrb[0].mxu0
        %v1465 = vadd.f32 %v1377, %v1464
        %v1466 = vpop.f32.mrb[0].mxu0
        %1467 = vdwg.mxu0
        %v1468 = vpack.c.bf16 %v1465, %v1462
        %v1470 = vunpack.c.l.b16 %v1468
        %v1471 = vunpack.c.h.b16 %v1468
        %v1472 = vpack.c.b16 %v1470, %v1470
        %v1473 = vpack.c.b16 %v1471, %v1471
        %1476 = vst [vmem:[%s883] sm:$0xf] %v1472
        %1477 = vst [vmem:[%s883 + $0x4] sm:$0xf] %v1473
        %s1478 = sld [smem:[#allocation5 + %s71]]
        %v1479 = vstv %s1478
        %vm1480 = vcmp.ge.s32.totalorder %v1046, %v1479
        %vm1481 = vcmp.ge.s32.totalorder %v1047, %v1479
        %v1482 = vsub.f32 %v1462, %v1112
        %v1483 = vsub.f32 %v1465, %v1113
        %v1484 = vsel %vm1480, 1, 0
        %v1485 = vsel %vm1481, 1, 0
        %vm1486 = vcmp.eq.s32.totalorder %v1484, 1
        %vm1487 = vcmp.eq.s32.totalorder %v1485, 1
        %v1488 = vsel %vm1486, 0.0, %v1482
        %v1489 = vsel %vm1487, 0.0, %v1483
        %v1490 = vmul.f32 %v1488, %v1488
        %v1491 = vmul.f32 %v1489, %v1489
        %v1492 = vadd.f32 %v1490, %v1491
        %1493 = vadd.xlane.f32.xlu0 %v1492
        %v1494 = vpop.xlane.xlu0 %1493
        %v1495 = vrot.slane %v1494, 4
        %v1496 = vadd.f32 %v1494, %v1495
        %v1497 = vrot.slane %v1496, 2
        %v1498 = vadd.f32 %v1496, %v1497
        %v1499 = vrot.slane %v1498, 1
        %v1500 = vadd.f32 %v1498, %v1499
        %s1501 = vtos %v1500
        %v1502 = vstv %s1501
        %vm1503 = vcmask 0
        %1504 = vst.msk [vmem:[%s918] sm:$0x1] %vm1503, %v1502
        %s1505 = sand.u32 %s488, 1
        %s1506 = scalar_lea.sflag [#allocation9], %s1505
        %s1507 = sand.u32 %s488, 1
        %s1508 = smul.addr %s1507, 8
        %s1509 = scalar_lea.vmem [#allocation22], %s1508
        %s1510 = sand.u32 %s516, 1
        %s1511 = scalar_lea.sflag [#allocation24], %s1510
        %s1512 = sand.u32 %s516, 1
        %s1513 = smul.addr %s1512, 8
        %s1514 = scalar_lea.vmem [#allocation23], %s1513
        %s1515 = sadd.s32 %s71, %s72
        %p1516 = scmp.lt.s32.totalorder %s1515, 1
        %s1517 = scalar_select %p1516, %s1515, 1
        %s1518 = scalar_lea.vmem %s23, %s1517
        // Predicated region
        $region121: #{tpu_custom_call.1} parent=87 // pred_check
          %p1519 = pneg %p498
        $region122: #{tpu_custom_call.1} parent=87 // pred_check_branch
          %1521 = sbr.rel (%p1519) target = $region124
        $region123: #{tpu_custom_call.1} parent=87 // pred_region
          %s1522 = smul.u32 2, %s72
          %s1524 = ssub.s32 128, 128
          %1525 = vsyncadd %s1506, %s1524
          %s1526 = smul.addr %s71, 2
          %s1527 = sadd.s32 %s1522, %s1526
          %s1528 = smul.addr %s1527, 64
          %s1529 = scalar_lea.hbm %s21, %s1528
          %s1530 = sshll.u32 %s1509, 4
          %s1531 = int_to_ptr.vmem [resolvable:$true] %s1530
          %1536 = dma.vmem_to_hbm [thread:$0]  %s1531, 128, %s1529, %s1506, 64, 64, 4
        $region124: #{tpu_custom_call.1} parent=87 // pred_fallthru
          _
        // Predicated region
        $region125: #{tpu_custom_call.1} parent=87 // pred_check
          %p1537 = pneg %p526
        $region126: #{tpu_custom_call.1} parent=87 // pred_check_branch
          %1539 = sbr.rel (%p1537) target = $region128
        $region127: #{tpu_custom_call.1} parent=87 // pred_region
          %s1540 = smul.u32 2, %s72
          %s1542 = ssub.s32 128, 128
          %1543 = vsyncadd %s1511, %s1542
          %s1544 = smul.addr %s71, 2
          %s1545 = sadd.s32 %s1540, %s1544
          %s1546 = smul.addr %s1545, 64
          %s1547 = scalar_lea.hbm %s22, %s1546
          %s1548 = sshll.u32 %s1514, 4
          %s1549 = int_to_ptr.vmem [resolvable:$true] %s1548
          %1554 = dma.vmem_to_hbm [thread:$0]  %s1549, 128, %s1547, %s1511, 64, 64, 4
        $region128: #{tpu_custom_call.1} parent=87 // pred_fallthru
          _
        // Predicated region
        $region129: #{tpu_custom_call.1} parent=87 // pred_check
          %p1555 = pneg %p554
        $region130: #{tpu_custom_call.1} parent=87 // pred_check_branch
          %1557 = sbr.rel (%p1555) target = $region132
        $region131: #{tpu_custom_call.1} parent=87 // pred_region
          %s1558 = sadd.s32 %s71, %s72
        $region132: #{tpu_custom_call.1} parent=87 // pred_fallthru
          _
      $region88: #{tpu_custom_call.1} parent=5 // pred_fallthru
        _
      %p1559 = scmp.le.s32.totalorder 2, %s62
      // Predicated region
      $region133: #{tpu_custom_call.1} parent=5 // pred_check
        %p1560 = pneg %p1559
      $region134: #{tpu_custom_call.1} parent=5 // pred_check_branch
        %1562 = sbr.rel (%p1560) target = $region136
      $region135: #{tpu_custom_call.1} parent=5 // pred_region
        %s1563 = ssub.s32 %s62, 2
        // Predicated region
        $region137: #{tpu_custom_call.1} parent=135 // pred_check
          %p1564 = pneg %p504
        $region138: #{tpu_custom_call.1} parent=135 // pred_check_branch
          %1566 = sbr.rel (%p1564) target = $region140
        $region139: #{tpu_custom_call.1} parent=135 // pred_region
          %s1567 = sand.u32 %s489, 1
          %s1568 = scalar_lea.sflag [#allocation9], %s1567
          %s1569 = sand.u32 %s489, 1
          %s1570 = smul.addr %s1569, 8
          %s1571 = scalar_lea.vmem [#allocation22], %s1570
          %1572 = dma.done %s1568, 128
        $region140: #{tpu_custom_call.1} parent=135 // pred_fallthru
          _
        // Predicated region
        $region141: #{tpu_custom_call.1} parent=135 // pred_check
          %p1573 = pneg %p532
        $region142: #{tpu_custom_call.1} parent=135 // pred_check_branch
          %1575 = sbr.rel (%p1573) target = $region144
        $region143: #{tpu_custom_call.1} parent=135 // pred_region
          %s1576 = sand.u32 %s517, 1
          %s1577 = scalar_lea.sflag [#allocation24], %s1576
          %s1578 = sand.u32 %s517, 1
          %s1579 = smul.addr %s1578, 8
          %s1580 = scalar_lea.vmem [#allocation23], %s1579
          %1581 = dma.done %s1577, 128
        $region144: #{tpu_custom_call.1} parent=135 // pred_fallthru
          _
        // Predicated region
        $region145: #{tpu_custom_call.1} parent=135 // pred_check
          %p1582 = pneg %p560
        $region146: #{tpu_custom_call.1} parent=135 // pred_check_branch
          %1584 = sbr.rel (%p1582) target = $region148
        $region147: #{tpu_custom_call.1} parent=135 // pred_region
          %s1585 = sadd.s32 %s73, %s74
          %p1586 = scmp.lt.s32.totalorder %s1585, 1
          %s1587 = scalar_select %p1586, %s1585, 1
          %s1588 = scalar_lea.vmem %s23, %s1587
        $region148: #{tpu_custom_call.1} parent=135 // pred_fallthru
          _
      $region136: #{tpu_custom_call.1} parent=5 // pred_fallthru
        _
    $region6: #{tpu_custom_call.1} parent=1 // loop_footer
      %s66 = sadd.s32 1, %s62
    $region7: #{tpu_custom_call.1} parent=1 // loop_footer_branch
      %61 = sbr.rel target = $region3
    $region8: #{tpu_custom_call.1} parent=1 // loop_exit
      _
    %1589 = vsyncpa [#allocation8], 1
    %s1590 = scalar_lea.sflag [#allocation8], 1
    %1591 = vsyncpa %s1590, 1
    %1592 = vsyncpa [#allocation12], 1
    %s1593 = scalar_lea.sflag [#allocation12], 1
    %1594 = vsyncpa %s1593, 1
    %1595 = vsyncpa [#allocation18], 1
    %1596 = vsyncpa [#allocation21], 1
    %1597 = vsyncpa [#allocation9], 1
    %s1598 = scalar_lea.sflag [#allocation9], 1
    %1599 = vsyncpa %s1598, 1
    %1600 = vsyncpa [#allocation24], 1
    %s1601 = scalar_lea.sflag [#allocation24], 1
    %1602 = vsyncpa %s1601, 1
    %1603 = vsyncpa [#allocation10], 1
    %s1604 = scalar_lea.sflag [#allocation10], 1
    %1605 = vsyncpa %s1604, 1
    %1606 = vsyncpa [#allocation16], 1

</llo_original>
